<compile_context>
chip_gen: v5e
topology: v5e:2x2
jax: 0.10.0
libtpu: 0.0.40
codegen_flags: <defaults>
</compile_context>

<pallas_src>
import numpy as np
import jax
import jax.numpy as jnp
from jax.experimental import pallas as pl
from jax.experimental.pallas import tpu as pltpu

# ----------------------------- configuration -------------------------------
IMAGE_SIZE = 16
PATCH_SIZE = 8
CHANNELS = 3
NUM_CLASSES = 10
HIDDEN_DIM = 64      # FeedForward hidden dim
EMBED_DIM = 32       # embedding_dim
NUM_HEADS = 4
D_MODEL = 16         # per-head dim (torch arg d_model)
DEPTH = 2            # Transformer has 2 (attn, ff) layers
BATCH = 2
EPS = 1e-5           # nn.LayerNorm default

H_PATCHES = IMAGE_SIZE // PATCH_SIZE
W_PATCHES = IMAGE_SIZE // PATCH_SIZE
NUM_TOKENS = H_PATCHES * W_PATCHES                 # 4
PATCH_DIM = PATCH_SIZE * PATCH_SIZE * CHANNELS     # 192
HEADS_DIM = NUM_HEADS * D_MODEL                    # 64
SCALE = float(D_MODEL) ** -0.5
INV_SQRT2 = 0.7071067811865476

BN_TOTAL = BATCH * NUM_TOKENS                      # 8  (all tokens, all images)
HBN = NUM_HEADS * BN_TOTAL                         # 32 (head-stacked rows)
OUT_PAD_ROWS = 8                                   # (8,128)-aligned output tile
OUT_PAD_COLS = 128
NEG_BIG = -1e9                                     # f32-only mask bias

# Row layout of the packed f32 "vec" slab (all E-wide vectors in one array).
IDX_PG2, IDX_PB2 = 0, 1           # patch-embedding second LayerNorm
IDX_FG, IDX_FB = 2, 3             # final transformer LayerNorm
IDX_POS = 4                       # positional embedding, tiled over batch (BN rows)
IDX_ALN = IDX_POS + BN_TOTAL      # per-layer attention LN gamma/beta pairs
IDX_FLN = IDX_ALN + 2 * DEPTH     # per-layer feedforward LN gamma/beta pairs
IDX_B2 = IDX_FLN + 2 * DEPTH      # per-layer second FF bias
VEC_ROWS = IDX_B2 + DEPTH


# --------------------------- positional embedding --------------------------
def posemb_sincos_2d(h, w, dim, temperature=10000.0):
    y, x = jnp.meshgrid(jnp.arange(h), jnp.arange(w), indexing="ij")
    omega = jnp.arange(dim // 4) / (dim // 4 - 1)
    omega = 1.0 / (temperature ** omega)
    y = y.flatten()[:, None] * omega[None, :]
    x = x.flatten()[:, None] * omega[None, :]
    pe = jnp.concatenate([jnp.sin(x), jnp.cos(x), jnp.sin(y), jnp.cos(y)], axis=1)
    return pe.astype(jnp.float32)


# ------------------------------- kernel math --------------------------------
def _layernorm(x, g, b):
    # mean and mean-of-squares as two INDEPENDENT cross-lane reductions
    # (var = E[x^2] - mu^2) so they can overlap on the XLU.
    mu = jnp.mean(x, axis=-1, keepdims=True)
    ms = jnp.mean(x * x, axis=-1, keepdims=True)
    var = jnp.maximum(ms - mu * mu, 0.0)
    return (x - mu) * jax.lax.rsqrt(var + EPS) * g + b


def _erf(x):
    # Abramowitz & Stegun 7.1.26 rational approximation (|err| < 1.5e-7) so the
    # exact (erf-based) nn.GELU matches torch to tolerance using only
    # exp / mul / add / where (all lower cleanly in Mosaic).
    a1, a2, a3, a4, a5 = 0.254829592, -0.284496736, 1.421413741, -1.453152027, 1.061405429
    p = 0.3275911
    ax = jnp.abs(x)
    t = 1.0 / (1.0 + p * ax)
    poly = ((((a5 * t + a4) * t + a3) * t + a2) * t + a1) * t
    y = 1.0 - poly * jnp.exp(-ax * ax)
    return jnp.where(x < 0, -y, y)


def _gelu_exact(x):
    return 0.5 * x * (1.0 + _erf(x * INV_SQRT2))


def vit_kernel(tok_ref, lnp_ref, wpb_ref, vec_ref, wq_ref, wk_ref, wv_ref,
               wout_ref, w1b_ref, w2_ref, whb_ref, maskb_ref, hmask_ref,
               pmat_ref, o_ref):
    f32 = jnp.float32
    bf16 = jnp.bfloat16
    BN, E, H, HD = BN_TOTAL, EMBED_DIM, NUM_HEADS, HEADS_DIM

    vec = vec_ref[...]                                   # (VEC_ROWS, E)  f32
    lnp = lnp_ref[...]                                   # (2, PATCH_DIM) f32
    wpb = wpb_ref[...]                                   # (PATCH_DIM+1, E) bf16
    maskb = maskb_ref[...]                               # (H*BN, BN) f32 batch mask
    hmask = hmask_ref[...]                               # (H*BN, HD) f32 head mask

    # ---- to_patch_embedding: LN(patch_dim) -> Linear(+bias) -> LN(E) + pos ----
    x = tok_ref[...]                                     # (BN, PATCH_DIM) f32
    h = _layernorm(x, lnp[0:1], lnp[1:2])
    h = jnp.dot(h.astype(bf16), wpb[:PATCH_DIM],
                preferred_element_type=f32) + wpb[PATCH_DIM:].astype(f32)
    h = _layernorm(h, vec[IDX_PG2:IDX_PG2 + 1], vec[IDX_PB2:IDX_PB2 + 1])
    tokens = h + vec[IDX_POS:IDX_POS + BN]               # (BN, E) f32

    for layer in range(DEPTH):
        # ----------------- Attention (pre-LN, residual), head-stacked ---------
        hn = _layernorm(tokens,
                        vec[IDX_ALN + 2 * layer:IDX_ALN + 2 * layer + 1],
                        vec[IDX_ALN + 2 * layer + 1:IDX_ALN + 2 * layer + 2])
        hnb = hn.astype(bf16)
        q = jnp.dot(hnb, wq_ref[layer], preferred_element_type=f32)   # (BN, HD), scaled
        k = jnp.dot(hnb, wk_ref[layer], preferred_element_type=f32)   # (BN, HD)
        v = jnp.dot(hnb, wv_ref[layer], preferred_element_type=f32)   # (BN, HD)

        # Stack heads along sublanes: row h*BN+i holds query token i, head h only.
        q_rep = jnp.concatenate([q] * H, axis=0)                      # (H*BN, HD)
        qm = q_rep * hmask
        # One (H*BN, BN) score matrix for all heads + both images; cross-batch
        # entries get -1e9 (softmax weight ~0), f32 score/softmax path throughout.
        s = jax.lax.dot_general(qm, k, (((1,), (1,)), ((), ())),
                                preferred_element_type=f32) + maskb
        s = s - jnp.max(s, axis=-1, keepdims=True)                    # stable softmax
        p = jnp.exp(s)
        p = p * pl.reciprocal(jnp.sum(p, axis=-1, keepdims=True), approx=True)
        o = jnp.dot(p, v, preferred_element_type=f32)                 # (H*BN, HD)
        om = (o * hmask).astype(bf16)                                 # keep own head cols
        z = jnp.dot(om, wout_ref[layer], preferred_element_type=f32)  # (H*BN, E)
        # Re-gather heads: sum the H sublane-aligned row blocks (free vreg picks).
        delta = z[0:BN]
        for hh in range(1, H):
            delta = delta + z[hh * BN:(hh + 1) * BN]
        tokens = tokens + delta

        # ---------------------- FeedForward (pre-LN, residual) ----------------
        hn = _layernorm(tokens,
                        vec[IDX_FLN + 2 * layer:IDX_FLN + 2 * layer + 1],
                        vec[IDX_FLN + 2 * layer + 1:IDX_FLN + 2 * layer + 2])
        w1b = w1b_ref[layer]                                          # (E+1, HID) bf16
        f = jnp.dot(hn.astype(bf16), w1b[:E],
                    preferred_element_type=f32) + w1b[E:].astype(f32)
        f = _gelu_exact(f)                                            # f32 elementwise
        f = jnp.dot(f.astype(bf16), w2_ref[layer], preferred_element_type=f32) \
            + vec[IDX_B2 + layer:IDX_B2 + layer + 1]
        tokens = tokens + f

    # ---------- final norm, mean pool over tokens, classifier head ----------
    outn = _layernorm(tokens, vec[IDX_FG:IDX_FG + 1], vec[IDX_FB:IDX_FB + 1])
    # pool matrix is (8, BN): rows 0..BATCH-1 average each image's tokens, the
    # rest are zero padding so the final store is a full (8, 128) tile.
    pooled = jnp.dot(pmat_ref[...], outn.astype(bf16), preferred_element_type=f32)
    whb = whb_ref[...]                                   # (E+1, 128) bf16 (padded head)
    o_ref[...] = jnp.dot(pooled.astype(bf16), whb[:E],
                         preferred_element_type=f32) + whb[E:].astype(jnp.float32)


# ------------------------------ JAX glue ------------------------------------
def patchify(img):
    # 'b c (h p1) (w p2) -> b (h w) (p1 p2 c)'
    B, C, Hh, Ww = img.shape
    hh, ww = Hh // PATCH_SIZE, Ww // PATCH_SIZE
    x = img.reshape(B, C, hh, PATCH_SIZE, ww, PATCH_SIZE)
    x = jnp.transpose(x, (0, 2, 4, 3, 5, 1))             # b h w p1 p2 c
    return x.reshape(B, hh * ww, PATCH_SIZE * PATCH_SIZE * C)


def _const_masks():
    """Host-side constants: batch block-diag bias, head block-diag mask, pool mat."""
    tok_batch = np.arange(BN_TOTAL) // NUM_TOKENS
    same = tok_batch[:, None] == tok_batch[None, :]                   # (BN, BN)
    maskb = np.where(same, 0.0, NEG_BIG).astype(np.float32)
    maskb = np.tile(maskb, (NUM_HEADS, 1))                            # (H*BN, BN)
    hmask = np.zeros((HBN, HEADS_DIM), np.float32)
    for h in range(NUM_HEADS):
        hmask[h * BN_TOTAL:(h + 1) * BN_TOTAL, h * D_MODEL:(h + 1) * D_MODEL] = 1.0
    pmat = np.zeros((OUT_PAD_ROWS, BN_TOTAL), np.float32)
    for b in range(BATCH):
        pmat[b, b * NUM_TOKENS:(b + 1) * NUM_TOKENS] = 1.0 / NUM_TOKENS
    return maskb, hmask, pmat


def pack_params(params):
    """Repack torch-layout params into lane-dense slabs; matmul weights in bf16."""
    (pg1, pb1, wp, bp, pg2, pb2, pos, aln_g, aln_b, wqkv, wout,
     fln_g, fln_b, w1, b1, w2, b2, fg, fb, wh, bh) = params
    bf16 = jnp.bfloat16

    lnp = jnp.concatenate([pg1, pb1], axis=0)                         # (2, PATCH_DIM) f32
    wpb = jnp.concatenate([wp, bp], axis=0).astype(bf16)              # (PATCH_DIM+1, E)
    rows = [pg2, pb2, fg, fb, jnp.tile(pos, (BATCH, 1))]
    for l in range(DEPTH):
        rows += [aln_g[l], aln_b[l]]
    for l in range(DEPTH):
        rows += [fln_g[l], fln_b[l]]
    for l in range(DEPTH):
        rows += [b2[l]]
    vec = jnp.concatenate(rows, axis=0)                               # (VEC_ROWS, E) f32

    # Separate Q/K/V slabs (no lane slices in-kernel); attention scale folded into Q.
    wq = (wqkv[:, :, :HEADS_DIM] * SCALE).astype(bf16)                # (DEPTH, E, HD)
    wk = wqkv[:, :, HEADS_DIM:2 * HEADS_DIM].astype(bf16)
    wv = wqkv[:, :, 2 * HEADS_DIM:].astype(bf16)
    woutb = wout.astype(bf16)                                         # (DEPTH, HD, E)
    w1b = jnp.concatenate([w1, b1], axis=1).astype(bf16)              # (DEPTH, E+1, HID)
    w2b = w2.astype(bf16)                                             # (DEPTH, HID, E)

    # Classifier head padded to 128 lanes for an unmasked full-tile output store.
    wh_pad = jnp.zeros((EMBED_DIM, OUT_PAD_COLS), jnp.float32).at[:, :NUM_CLASSES].set(wh)
    bh_pad = jnp.zeros((1, OUT_PAD_COLS), jnp.float32).at[:, :NUM_CLASSES].set(bh)
    whb = jnp.concatenate([wh_pad, bh_pad], axis=0).astype(bf16)      # (E+1, 128)

    maskb_np, hmask_np, pmat_np = _const_masks()
    return (lnp, wpb, vec, wq, wk, wv, woutb, w1b, w2b, whb,
            jnp.asarray(maskb_np), jnp.asarray(hmask_np),
            jnp.asarray(pmat_np, dtype=bf16))


@jax.jit
def vit_forward(img, params):
    # Flatten tokens once in the wrapper; the kernel works on 2D (B*N, F) slabs.
    tokens = patchify(img).astype(jnp.float32).reshape(-1, PATCH_DIM)
    inputs = (tokens,) + pack_params(params)
    vmem = pl.BlockSpec(memory_space=pltpu.MemorySpace.VMEM)

    # Advisory cost estimate (whole model, single grid-less invocation).
    BN, HD = BN_TOTAL, HEADS_DIM
    flops = 2 * BN * PATCH_DIM * EMBED_DIM
    flops += DEPTH * (3 * 2 * BN * EMBED_DIM * HD        # Q/K/V projections
                      + 2 * HBN * HD * BN                # stacked scores
                      + 2 * HBN * BN * HD                # P @ V
                      + 2 * HBN * HD * EMBED_DIM         # out-projection
                      + 2 * 2 * BN * EMBED_DIM * HIDDEN_DIM)   # FF matmuls
    flops += 2 * OUT_PAD_ROWS * BN * EMBED_DIM + 2 * OUT_PAD_ROWS * EMBED_DIM * OUT_PAD_COLS
    transcendentals = DEPTH * (HBN * BN + 2 * BN * HIDDEN_DIM)
    bytes_accessed = sum(int(np.prod(a.shape)) * a.dtype.itemsize for a in inputs) \
        + OUT_PAD_ROWS * OUT_PAD_COLS * 4

    # NOTE(v7x): at BATCH=2 / 4 tokens per image the kernel is latency-bound, so we
    # keep a single grid-less invocation (both images fused via the block-diagonal
    # mask) instead of a per-batch "parallel" grid; revisit for larger batch/seq.
    padded = pl.pallas_call(
        vit_kernel,
        out_shape=jax.ShapeDtypeStruct((OUT_PAD_ROWS, OUT_PAD_COLS), jnp.float32),
        in_specs=[vmem] * len(inputs),
        out_specs=vmem,
        cost_estimate=pl.CostEstimate(flops=int(flops),
                                      transcendentals=int(transcendentals),
                                      bytes_accessed=int(bytes_accessed)),
    )(*inputs)
    return padded[:img.shape[0], :NUM_CLASSES]


def init_params(key):
    keys = iter(jax.random.split(key, 24))

    def rnd(shape, scale=0.05):
        return (scale * jax.random.normal(next(keys), shape)).astype(jnp.float32)

    E, PD, HID = EMBED_DIM, PATCH_DIM, HIDDEN_DIM
    pg1 = 1.0 + rnd((1, PD));            pb1 = rnd((1, PD))
    wp = rnd((PD, E));                   bp = rnd((1, E))
    pg2 = 1.0 + rnd((1, E));             pb2 = rnd((1, E))
    pos = posemb_sincos_2d(H_PATCHES, W_PATCHES, E)
    aln_g = 1.0 + rnd((DEPTH, 1, E));    aln_b = rnd((DEPTH, 1, E))
    wqkv = rnd((DEPTH, E, 3 * HEADS_DIM))   # fused to_qkv weight, (in, out) layout
    wout = rnd((DEPTH, HEADS_DIM, E))       # to_out weight, (in, out) layout
    fln_g = 1.0 + rnd((DEPTH, 1, E));    fln_b = rnd((DEPTH, 1, E))
    w1 = rnd((DEPTH, E, HID));           b1 = rnd((DEPTH, 1, HID))
    w2 = rnd((DEPTH, HID, E));           b2 = rnd((DEPTH, 1, E))
    fg = 1.0 + rnd((1, E));              fb = rnd((1, E))
    wh = rnd((E, NUM_CLASSES));          bh = rnd((1, NUM_CLASSES))
    return (pg1, pb1, wp, bp, pg2, pb2, pos, aln_g, aln_b, wqkv, wout,
            fln_g, fln_b, w1, b1, w2, b2, fg, fb, wh, bh)


# ----------------------- pure-JAX reference (torch-style, f32) --------------
def vit_reference(img, params):
    (pg1, pb1, wp, bp, pg2, pb2, pos, aln_g, aln_b, wqkv, wout,
     fln_g, fln_b, w1, b1, w2, b2, fg, fb, wh, bh) = params
    H, D = NUM_HEADS, D_MODEL

    def ln(x, g, b):
        mu = x.mean(-1, keepdims=True)
        var = ((x - mu) ** 2).mean(-1, keepdims=True)
        return (x - mu) / jnp.sqrt(var + EPS) * g + b

    x = patchify(img).astype(jnp.float32)
    h = ln(x, pg1, pb1) @ wp + bp
    h = ln(h, pg2, pb2) + pos
    B, N, _ = h.shape
    for l in range(DEPTH):
        a = ln(h, aln_g[l], aln_b[l]) @ wqkv[l]                 # (B, N, 3*H*D)
        q, k, v = jnp.split(a, 3, axis=-1)
        to_heads = lambda t: t.reshape(B, N, H, D).transpose(0, 2, 1, 3)
        q, k, v = to_heads(q), to_heads(k), to_heads(v)
        s = jnp.einsum("bhnd,bhmd->bhnm", q, k) * SCALE
        p = jax.nn.softmax(s, axis=-1)
        o = jnp.einsum("bhnm,bhmd->bhnd", p, v)
        o = o.transpose(0, 2, 1, 3).reshape(B, N, H * D)
        h = o @ wout[l] + h
        f = ln(h, fln_g[l], fln_b[l]) @ w1[l] + b1[l]
        f = jax.nn.gelu(f, approximate=False)
        h = f @ w2[l] + b2[l] + h
    h = ln(h, fg, fb)
    return h.mean(axis=1) @ wh + bh


if __name__ == "__main__":
    key = jax.random.PRNGKey(0)
    pkey, xkey = jax.random.split(key)
    params = init_params(pkey)
    img = jax.random.normal(xkey, (BATCH, CHANNELS, IMAGE_SIZE, IMAGE_SIZE),
                            dtype=jnp.float32)

    out = vit_forward(img, params)
    out = jax.block_until_ready(out)
    assert out.shape == (BATCH, NUM_CLASSES)

    # Reference is pure f32; the kernel uses bf16 MXU operands (f32 accumulation),
    # so compare with a mixed-precision-appropriate tolerance.
    ref = vit_reference(img, params)
    np.testing.assert_allclose(np.asarray(out), np.asarray(ref), rtol=2e-2, atol=2e-2)
    print("KERNEL_OK")
</pallas_src>

<mosaic_0001>
module attributes {stable_mosaic.version = 11 : i64} {
  func.func @vit_kernel(%arg0: memref<8x192xf32, #tpu.memory_space<vmem>>, %arg1: memref<2x192xf32, #tpu.memory_space<vmem>>, %arg2: memref<193x32xbf16, #tpu.memory_space<vmem>>, %arg3: memref<22x32xf32, #tpu.memory_space<vmem>>, %arg4: memref<2x32x64xbf16, #tpu.memory_space<vmem>>, %arg5: memref<2x32x64xbf16, #tpu.memory_space<vmem>>, %arg6: memref<2x32x64xbf16, #tpu.memory_space<vmem>>, %arg7: memref<2x64x32xbf16, #tpu.memory_space<vmem>>, %arg8: memref<2x33x64xbf16, #tpu.memory_space<vmem>>, %arg9: memref<2x64x32xbf16, #tpu.memory_space<vmem>>, %arg10: memref<33x128xbf16, #tpu.memory_space<vmem>>, %arg11: memref<32x8xf32, #tpu.memory_space<vmem>>, %arg12: memref<32x64xf32, #tpu.memory_space<vmem>>, %arg13: memref<8x8xbf16, #tpu.memory_space<vmem>>, %arg14: memref<8x128xf32, #tpu.memory_space<vmem>>) attributes {dimension_semantics = [], scalar_prefetch = 0 : i64, scratch_operands = 0 : i64, tpu.core_type = #tpu.core_type<tc>} {
    %c0 = arith.constant 0 : index
    %c0_0 = arith.constant 0 : index
    %0 = vector.load %arg3[%c0, %c0_0] : memref<22x32xf32, #tpu.memory_space<vmem>>, vector<22x32xf32>
    %c0_1 = arith.constant 0 : index
    %c0_2 = arith.constant 0 : index
    %1 = vector.load %arg1[%c0_1, %c0_2] : memref<2x192xf32, #tpu.memory_space<vmem>>, vector<2x192xf32>
    %c0_3 = arith.constant 0 : index
    %c0_4 = arith.constant 0 : index
    %2 = vector.load %arg2[%c0_3, %c0_4] : memref<193x32xbf16, #tpu.memory_space<vmem>>, vector<193x32xbf16>
    %c0_5 = arith.constant 0 : index
    %c0_6 = arith.constant 0 : index
    %3 = vector.load %arg11[%c0_5, %c0_6] : memref<32x8xf32, #tpu.memory_space<vmem>>, vector<32x8xf32>
    %c0_7 = arith.constant 0 : index
    %c0_8 = arith.constant 0 : index
    %4 = vector.load %arg12[%c0_7, %c0_8] : memref<32x64xf32, #tpu.memory_space<vmem>>, vector<32x64xf32>
    %c0_9 = arith.constant 0 : index
    %c0_10 = arith.constant 0 : index
    %5 = vector.load %arg0[%c0_9, %c0_10] : memref<8x192xf32, #tpu.memory_space<vmem>>, vector<8x192xf32>
    %6 = vector.extract_strided_slice %1 {offsets = [0, 0], sizes = [1, 192], strides = [1, 1]} : vector<2x192xf32> to vector<1x192xf32>
    %7 = vector.extract_strided_slice %1 {offsets = [1, 0], sizes = [1, 192], strides = [1, 1]} : vector<2x192xf32> to vector<1x192xf32>
    %cst = arith.constant dense<0.000000e+00> : vector<8xf32>
    %8 = vector.multi_reduction <add>, %5, %cst [1] : vector<8x192xf32> to vector<8xf32>
    %9 = vector.shape_cast %8 : vector<8xf32> to vector<8x1xf32>
    %cst_11 = arith.constant 1.920000e+02 : f32
    %10 = vector.broadcast %cst_11 : f32 to vector<8x1xf32>
    %11 = arith.divf %9, %10 : vector<8x1xf32>
    %12 = arith.mulf %5, %5 : vector<8x192xf32>
    %cst_12 = arith.constant dense<0.000000e+00> : vector<8xf32>
    %13 = vector.multi_reduction <add>, %12, %cst_12 [1] : vector<8x192xf32> to vector<8xf32>
    %14 = vector.shape_cast %13 : vector<8xf32> to vector<8x1xf32>
    %cst_13 = arith.constant 1.920000e+02 : f32
    %15 = vector.broadcast %cst_13 : f32 to vector<8x1xf32>
    %16 = arith.divf %14, %15 : vector<8x1xf32>
    %17 = arith.mulf %11, %11 : vector<8x1xf32>
    %18 = arith.subf %16, %17 : vector<8x1xf32>
    %cst_14 = arith.constant 0.000000e+00 : f32
    %19 = vector.broadcast %cst_14 : f32 to vector<8x1xf32>
    %20 = arith.maximumf %18, %19 : vector<8x1xf32>
    %21 = vector.broadcast %11 : vector<8x1xf32> to vector<8x192xf32>
    %22 = arith.subf %5, %21 : vector<8x192xf32>
    %cst_15 = arith.constant 9.99999974E-6 : f32
    %23 = vector.broadcast %cst_15 : f32 to vector<8x1xf32>
    %24 = arith.addf %20, %23 : vector<8x1xf32>
    %25 = math.rsqrt %24 : vector<8x1xf32>
    %26 = vector.broadcast %25 : vector<8x1xf32> to vector<8x192xf32>
    %27 = arith.mulf %22, %26 : vector<8x192xf32>
    %28 = vector.broadcast %6 : vector<1x192xf32> to vector<8x192xf32>
    %29 = arith.mulf %27, %28 : vector<8x192xf32>
    %30 = vector.broadcast %7 : vector<1x192xf32> to vector<8x192xf32>
    %31 = arith.addf %29, %30 : vector<8x192xf32>
    %32 = arith.truncf %31 : vector<8x192xf32> to vector<8x192xbf16>
    %33 = vector.extract_strided_slice %2 {offsets = [0, 0], sizes = [192, 32], strides = [1, 1]} : vector<193x32xbf16> to vector<192x32xbf16>
    %cst_16 = arith.constant dense<0.000000e+00> : vector<8x32xf32>
    %34 = tpu.matmul %32, %33, %cst_16 {dimension_numbers = #tpu.dot_dimension_numbers<[1], [0], [0], [1], [0, 0, 1, 1], [], []>} : vector<8x192xbf16>, vector<192x32xbf16>, vector<8x32xf32> -> vector<8x32xf32>
    %35 = vector.extract_strided_slice %2 {offsets = [192, 0], sizes = [1, 32], strides = [1, 1]} : vector<193x32xbf16> to vector<1x32xbf16>
    %36 = arith.extf %35 : vector<1x32xbf16> to vector<1x32xf32>
    %37 = vector.broadcast %36 : vector<1x32xf32> to vector<8x32xf32>
    %38 = arith.addf %34, %37 : vector<8x32xf32>
    %39 = vector.extract_strided_slice %0 {offsets = [0, 0], sizes = [1, 32], strides = [1, 1]} : vector<22x32xf32> to vector<1x32xf32>
    %40 = vector.extract_strided_slice %0 {offsets = [1, 0], sizes = [1, 32], strides = [1, 1]} : vector<22x32xf32> to vector<1x32xf32>
    %cst_17 = arith.constant dense<0.000000e+00> : vector<8xf32>
    %41 = vector.multi_reduction <add>, %38, %cst_17 [1] : vector<8x32xf32> to vector<8xf32>
    %42 = vector.shape_cast %41 : vector<8xf32> to vector<8x1xf32>
    %cst_18 = arith.constant 3.200000e+01 : f32
    %43 = vector.broadcast %cst_18 : f32 to vector<8x1xf32>
    %44 = arith.divf %42, %43 : vector<8x1xf32>
    %45 = arith.mulf %38, %38 : vector<8x32xf32>
    %cst_19 = arith.constant dense<0.000000e+00> : vector<8xf32>
    %46 = vector.multi_reduction <add>, %45, %cst_19 [1] : vector<8x32xf32> to vector<8xf32>
    %47 = vector.shape_cast %46 : vector<8xf32> to vector<8x1xf32>
    %cst_20 = arith.constant 3.200000e+01 : f32
    %48 = vector.broadcast %cst_20 : f32 to vector<8x1xf32>
    %49 = arith.divf %47, %48 : vector<8x1xf32>
    %50 = arith.mulf %44, %44 : vector<8x1xf32>
    %51 = arith.subf %49, %50 : vector<8x1xf32>
    %cst_21 = arith.constant 0.000000e+00 : f32
    %52 = vector.broadcast %cst_21 : f32 to vector<8x1xf32>
    %53 = arith.maximumf %51, %52 : vector<8x1xf32>
    %54 = vector.broadcast %44 : vector<8x1xf32> to vector<8x32xf32>
    %55 = arith.subf %38, %54 : vector<8x32xf32>
    %cst_22 = arith.constant 9.99999974E-6 : f32
    %56 = vector.broadcast %cst_22 : f32 to vector<8x1xf32>
    %57 = arith.addf %53, %56 : vector<8x1xf32>
    %58 = math.rsqrt %57 : vector<8x1xf32>
    %59 = vector.broadcast %58 : vector<8x1xf32> to vector<8x32xf32>
    %60 = arith.mulf %55, %59 : vector<8x32xf32>
    %61 = vector.broadcast %39 : vector<1x32xf32> to vector<8x32xf32>
    %62 = arith.mulf %60, %61 : vector<8x32xf32>
    %63 = vector.broadcast %40 : vector<1x32xf32> to vector<8x32xf32>
    %64 = arith.addf %62, %63 : vector<8x32xf32>
    %65 = vector.extract_strided_slice %0 {offsets = [4, 0], sizes = [8, 32], strides = [1, 1]} : vector<22x32xf32> to vector<8x32xf32>
    %66 = arith.addf %64, %65 : vector<8x32xf32>
    %67 = vector.extract_strided_slice %0 {offsets = [12, 0], sizes = [1, 32], strides = [1, 1]} : vector<22x32xf32> to vector<1x32xf32>
    %68 = vector.extract_strided_slice %0 {offsets = [13, 0], sizes = [1, 32], strides = [1, 1]} : vector<22x32xf32> to vector<1x32xf32>
    %cst_23 = arith.constant dense<0.000000e+00> : vector<8xf32>
    %69 = vector.multi_reduction <add>, %66, %cst_23 [1] : vector<8x32xf32> to vector<8xf32>
    %70 = vector.shape_cast %69 : vector<8xf32> to vector<8x1xf32>
    %cst_24 = arith.constant 3.200000e+01 : f32
    %71 = vector.broadcast %cst_24 : f32 to vector<8x1xf32>
    %72 = arith.divf %70, %71 : vector<8x1xf32>
    %73 = arith.mulf %66, %66 : vector<8x32xf32>
    %cst_25 = arith.constant dense<0.000000e+00> : vector<8xf32>
    %74 = vector.multi_reduction <add>, %73, %cst_25 [1] : vector<8x32xf32> to vector<8xf32>
    %75 = vector.shape_cast %74 : vector<8xf32> to vector<8x1xf32>
    %cst_26 = arith.constant 3.200000e+01 : f32
    %76 = vector.broadcast %cst_26 : f32 to vector<8x1xf32>
    %77 = arith.divf %75, %76 : vector<8x1xf32>
    %78 = arith.mulf %72, %72 : vector<8x1xf32>
    %79 = arith.subf %77, %78 : vector<8x1xf32>
    %cst_27 = arith.constant 0.000000e+00 : f32
    %80 = vector.broadcast %cst_27 : f32 to vector<8x1xf32>
    %81 = arith.maximumf %79, %80 : vector<8x1xf32>
    %82 = vector.broadcast %72 : vector<8x1xf32> to vector<8x32xf32>
    %83 = arith.subf %66, %82 : vector<8x32xf32>
    %cst_28 = arith.constant 9.99999974E-6 : f32
    %84 = vector.broadcast %cst_28 : f32 to vector<8x1xf32>
    %85 = arith.addf %81, %84 : vector<8x1xf32>
    %86 = math.rsqrt %85 : vector<8x1xf32>
    %87 = vector.broadcast %86 : vector<8x1xf32> to vector<8x32xf32>
    %88 = arith.mulf %83, %87 : vector<8x32xf32>
    %89 = vector.broadcast %67 : vector<1x32xf32> to vector<8x32xf32>
    %90 = arith.mulf %88, %89 : vector<8x32xf32>
    %91 = vector.broadcast %68 : vector<1x32xf32> to vector<8x32xf32>
    %92 = arith.addf %90, %91 : vector<8x32xf32>
    %93 = arith.truncf %92 : vector<8x32xf32> to vector<8x32xbf16>
    %c0_29 = arith.constant 0 : index
    %c0_30 = arith.constant 0 : index
    %c0_31 = arith.constant 0 : index
    %94 = vector.load %arg4[%c0_29, %c0_30, %c0_31] : memref<2x32x64xbf16, #tpu.memory_space<vmem>>, vector<1x32x64xbf16>
    %95 = vector.shape_cast %94 : vector<1x32x64xbf16> to vector<32x64xbf16>
    %cst_32 = arith.constant dense<0.000000e+00> : vector<8x64xf32>
    %96 = tpu.matmul %93, %95, %cst_32 {dimension_numbers = #tpu.dot_dimension_numbers<[1], [0], [0], [1], [0, 0, 1, 1], [], []>} : vector<8x32xbf16>, vector<32x64xbf16>, vector<8x64xf32> -> vector<8x64xf32>
    %c0_33 = arith.constant 0 : index
    %c0_34 = arith.constant 0 : index
    %c0_35 = arith.constant 0 : index
    %97 = vector.load %arg5[%c0_33, %c0_34, %c0_35] : memref<2x32x64xbf16, #tpu.memory_space<vmem>>, vector<1x32x64xbf16>
    %98 = vector.shape_cast %97 : vector<1x32x64xbf16> to vector<32x64xbf16>
    %cst_36 = arith.constant dense<0.000000e+00> : vector<8x64xf32>
    %99 = tpu.matmul %93, %98, %cst_36 {dimension_numbers = #tpu.dot_dimension_numbers<[1], [0], [0], [1], [0, 0, 1, 1], [], []>} : vector<8x32xbf16>, vector<32x64xbf16>, vector<8x64xf32> -> vector<8x64xf32>
    %c0_37 = arith.constant 0 : index
    %c0_38 = arith.constant 0 : index
    %c0_39 = arith.constant 0 : index
    %100 = vector.load %arg6[%c0_37, %c0_38, %c0_39] : memref<2x32x64xbf16, #tpu.memory_space<vmem>>, vector<1x32x64xbf16>
    %101 = vector.shape_cast %100 : vector<1x32x64xbf16> to vector<32x64xbf16>
    %cst_40 = arith.constant dense<0.000000e+00> : vector<8x64xf32>
    %102 = tpu.matmul %93, %101, %cst_40 {dimension_numbers = #tpu.dot_dimension_numbers<[1], [0], [0], [1], [0, 0, 1, 1], [], []>} : vector<8x32xbf16>, vector<32x64xbf16>, vector<8x64xf32> -> vector<8x64xf32>
    %103 = tpu.concatenate %96, %96, %96, %96 in 0 : vector<8x64xf32>, vector<8x64xf32>, vector<8x64xf32>, vector<8x64xf32> -> vector<32x64xf32>
    %104 = arith.mulf %103, %4 : vector<32x64xf32>
    %cst_41 = arith.constant dense<0.000000e+00> : vector<32x8xf32>
    %105 = tpu.matmul %104, %99, %cst_41 {dimension_numbers = #tpu.dot_dimension_numbers<[1], [1], [0], [0], [0, 0, 1, 0], [], []>} : vector<32x64xf32>, vector<8x64xf32>, vector<32x8xf32> -> vector<32x8xf32>
    %106 = arith.addf %105, %3 : vector<32x8xf32>
    %cst_42 = arith.constant dense<0xFF800000> : vector<32xf32>
    %107 = vector.multi_reduction <maximumf>, %106, %cst_42 [1] : vector<32x8xf32> to vector<32xf32>
    %108 = vector.shape_cast %107 : vector<32xf32> to vector<32x1xf32>
    %109 = vector.broadcast %108 : vector<32x1xf32> to vector<32x8xf32>
    %110 = arith.subf %106, %109 : vector<32x8xf32>
    %111 = math.exp %110 : vector<32x8xf32>
    %cst_43 = arith.constant dense<0.000000e+00> : vector<32xf32>
    %112 = vector.multi_reduction <add>, %111, %cst_43 [1] : vector<32x8xf32> to vector<32xf32>
    %113 = vector.shape_cast %112 : vector<32xf32> to vector<32x1xf32>
    %114 = tpu.reciprocal %113 {approx = true} : vector<32x1xf32> -> vector<32x1xf32>
    %115 = vector.broadcast %114 : vector<32x1xf32> to vector<32x8xf32>
    %116 = arith.mulf %111, %115 : vector<32x8xf32>
    %cst_44 = arith.constant dense<0.000000e+00> : vector<32x64xf32>
    %117 = tpu.matmul %116, %102, %cst_44 {dimension_numbers = #tpu.dot_dimension_numbers<[1], [0], [0], [1], [0, 0, 1, 1], [], []>} : vector<32x8xf32>, vector<8x64xf32>, vector<32x64xf32> -> vector<32x64xf32>
    %118 = arith.mulf %117, %4 : vector<32x64xf32>
    %119 = arith.truncf %118 : vector<32x64xf32> to vector<32x64xbf16>
    %c0_45 = arith.constant 0 : index
    %c0_46 = arith.constant 0 : index
    %c0_47 = arith.constant 0 : index
    %120 = vector.load %arg7[%c0_45, %c0_46, %c0_47] : memref<2x64x32xbf16, #tpu.memory_space<vmem>>, vector<1x64x32xbf16>
    %121 = vector.shape_cast %120 : vector<1x64x32xbf16> to vector<64x32xbf16>
    %cst_48 = arith.constant dense<0.000000e+00> : vector<32x32xf32>
    %122 = tpu.matmul %119, %121, %cst_48 {dimension_numbers = #tpu.dot_dimension_numbers<[1], [0], [0], [1], [0, 0, 1, 1], [], []>} : vector<32x64xbf16>, vector<64x32xbf16>, vector<32x32xf32> -> vector<32x32xf32>
    %123 = vector.extract_strided_slice %122 {offsets = [0, 0], sizes = [8, 32], strides = [1, 1]} : vector<32x32xf32> to vector<8x32xf32>
    %124 = vector.extract_strided_slice %122 {offsets = [8, 0], sizes = [8, 32], strides = [1, 1]} : vector<32x32xf32> to vector<8x32xf32>
    %125 = arith.addf %123, %124 : vector<8x32xf32>
    %126 = vector.extract_strided_slice %122 {offsets = [16, 0], sizes = [8, 32], strides = [1, 1]} : vector<32x32xf32> to vector<8x32xf32>
    %127 = arith.addf %125, %126 : vector<8x32xf32>
    %128 = vector.extract_strided_slice %122 {offsets = [24, 0], sizes = [8, 32], strides = [1, 1]} : vector<32x32xf32> to vector<8x32xf32>
    %129 = arith.addf %127, %128 : vector<8x32xf32>
    %130 = arith.addf %66, %129 : vector<8x32xf32>
    %131 = vector.extract_strided_slice %0 {offsets = [16, 0], sizes = [1, 32], strides = [1, 1]} : vector<22x32xf32> to vector<1x32xf32>
    %132 = vector.extract_strided_slice %0 {offsets = [17, 0], sizes = [1, 32], strides = [1, 1]} : vector<22x32xf32> to vector<1x32xf32>
    %cst_49 = arith.constant dense<0.000000e+00> : vector<8xf32>
    %133 = vector.multi_reduction <add>, %130, %cst_49 [1] : vector<8x32xf32> to vector<8xf32>
    %134 = vector.shape_cast %133 : vector<8xf32> to vector<8x1xf32>
    %cst_50 = arith.constant 3.200000e+01 : f32
    %135 = vector.broadcast %cst_50 : f32 to vector<8x1xf32>
    %136 = arith.divf %134, %135 : vector<8x1xf32>
    %137 = arith.mulf %130, %130 : vector<8x32xf32>
    %cst_51 = arith.constant dense<0.000000e+00> : vector<8xf32>
    %138 = vector.multi_reduction <add>, %137, %cst_51 [1] : vector<8x32xf32> to vector<8xf32>
    %139 = vector.shape_cast %138 : vector<8xf32> to vector<8x1xf32>
    %cst_52 = arith.constant 3.200000e+01 : f32
    %140 = vector.broadcast %cst_52 : f32 to vector<8x1xf32>
    %141 = arith.divf %139, %140 : vector<8x1xf32>
    %142 = arith.mulf %136, %136 : vector<8x1xf32>
    %143 = arith.subf %141, %142 : vector<8x1xf32>
    %cst_53 = arith.constant 0.000000e+00 : f32
    %144 = vector.broadcast %cst_53 : f32 to vector<8x1xf32>
    %145 = arith.maximumf %143, %144 : vector<8x1xf32>
    %146 = vector.broadcast %136 : vector<8x1xf32> to vector<8x32xf32>
    %147 = arith.subf %130, %146 : vector<8x32xf32>
    %cst_54 = arith.constant 9.99999974E-6 : f32
    %148 = vector.broadcast %cst_54 : f32 to vector<8x1xf32>
    %149 = arith.addf %145, %148 : vector<8x1xf32>
    %150 = math.rsqrt %149 : vector<8x1xf32>
    %151 = vector.broadcast %150 : vector<8x1xf32> to vector<8x32xf32>
    %152 = arith.mulf %147, %151 : vector<8x32xf32>
    %153 = vector.broadcast %131 : vector<1x32xf32> to vector<8x32xf32>
    %154 = arith.mulf %152, %153 : vector<8x32xf32>
    %155 = vector.broadcast %132 : vector<1x32xf32> to vector<8x32xf32>
    %156 = arith.addf %154, %155 : vector<8x32xf32>
    %c0_55 = arith.constant 0 : index
    %c0_56 = arith.constant 0 : index
    %c0_57 = arith.constant 0 : index
    %157 = vector.load %arg8[%c0_55, %c0_56, %c0_57] : memref<2x33x64xbf16, #tpu.memory_space<vmem>>, vector<1x33x64xbf16>
    %158 = vector.shape_cast %157 : vector<1x33x64xbf16> to vector<33x64xbf16>
    %159 = arith.truncf %156 : vector<8x32xf32> to vector<8x32xbf16>
    %160 = vector.extract_strided_slice %158 {offsets = [0, 0], sizes = [32, 64], strides = [1, 1]} : vector<33x64xbf16> to vector<32x64xbf16>
    %cst_58 = arith.constant dense<0.000000e+00> : vector<8x64xf32>
    %161 = tpu.matmul %159, %160, %cst_58 {dimension_numbers = #tpu.dot_dimension_numbers<[1], [0], [0], [1], [0, 0, 1, 1], [], []>} : vector<8x32xbf16>, vector<32x64xbf16>, vector<8x64xf32> -> vector<8x64xf32>
    %162 = vector.extract_strided_slice %158 {offsets = [32, 0], sizes = [1, 64], strides = [1, 1]} : vector<33x64xbf16> to vector<1x64xbf16>
    %163 = arith.extf %162 : vector<1x64xbf16> to vector<1x64xf32>
    %164 = vector.broadcast %163 : vector<1x64xf32> to vector<8x64xf32>
    %165 = arith.addf %161, %164 : vector<8x64xf32>
    %cst_59 = arith.constant 5.000000e-01 : f32
    %166 = vector.broadcast %cst_59 : f32 to vector<8x64xf32>
    %167 = arith.mulf %166, %165 : vector<8x64xf32>
    %cst_60 = arith.constant 0.707106769 : f32
    %168 = vector.broadcast %cst_60 : f32 to vector<8x64xf32>
    %169 = arith.mulf %165, %168 : vector<8x64xf32>
    %170 = math.absf %169 : vector<8x64xf32>
    %cst_61 = arith.constant 0.327591091 : f32
    %171 = vector.broadcast %cst_61 : f32 to vector<8x64xf32>
    %172 = arith.mulf %171, %170 : vector<8x64xf32>
    %cst_62 = arith.constant 1.000000e+00 : f32
    %173 = vector.broadcast %cst_62 : f32 to vector<8x64xf32>
    %174 = arith.addf %173, %172 : vector<8x64xf32>
    %cst_63 = arith.constant 1.000000e+00 : f32
    %175 = vector.broadcast %cst_63 : f32 to vector<8x64xf32>
    %176 = arith.divf %175, %174 : vector<8x64xf32>
    %cst_64 = arith.constant 1.06140542 : f32
    %177 = vector.broadcast %cst_64 : f32 to vector<8x64xf32>
    %178 = arith.mulf %177, %176 : vector<8x64xf32>
    %cst_65 = arith.constant -1.45315206 : f32
    %179 = vector.broadcast %cst_65 : f32 to vector<8x64xf32>
    %180 = arith.addf %178, %179 : vector<8x64xf32>
    %181 = arith.mulf %180, %176 : vector<8x64xf32>
    %cst_66 = arith.constant 1.42141378 : f32
    %182 = vector.broadcast %cst_66 : f32 to vector<8x64xf32>
    %183 = arith.addf %181, %182 : vector<8x64xf32>
    %184 = arith.mulf %183, %176 : vector<8x64xf32>
    %cst_67 = arith.constant -0.284496725 : f32
    %185 = vector.broadcast %cst_67 : f32 to vector<8x64xf32>
    %186 = arith.addf %184, %185 : vector<8x64xf32>
    %187 = arith.mulf %186, %176 : vector<8x64xf32>
    %cst_68 = arith.constant 0.254829586 : f32
    %188 = vector.broadcast %cst_68 : f32 to vector<8x64xf32>
    %189 = arith.addf %187, %188 : vector<8x64xf32>
    %190 = arith.mulf %189, %176 : vector<8x64xf32>
    %cst_69 = arith.constant 0.000000e+00 : f32
    %191 = vector.broadcast %cst_69 : f32 to vector<8x64xf32>
    %192 = arith.subf %191, %170 : vector<8x64xf32>
    %193 = arith.mulf %192, %170 : vector<8x64xf32>
    %194 = math.exp %193 : vector<8x64xf32>
    %195 = arith.mulf %190, %194 : vector<8x64xf32>
    %cst_70 = arith.constant 1.000000e+00 : f32
    %196 = vector.broadcast %cst_70 : f32 to vector<8x64xf32>
    %197 = arith.subf %196, %195 : vector<8x64xf32>
    %cst_71 = arith.constant 0.000000e+00 : f32
    %198 = vector.broadcast %cst_71 : f32 to vector<8x64xf32>
    %199 = arith.cmpf olt, %169, %198 : vector<8x64xf32>
    %cst_72 = arith.constant 0.000000e+00 : f32
    %200 = vector.broadcast %cst_72 : f32 to vector<8x64xf32>
    %201 = arith.subf %200, %197 : vector<8x64xf32>
    %202 = arith.select %199, %201, %197 : vector<8x64xi1>, vector<8x64xf32>
    %cst_73 = arith.constant 1.000000e+00 : f32
    %203 = vector.broadcast %cst_73 : f32 to vector<8x64xf32>
    %204 = arith.addf %203, %202 : vector<8x64xf32>
    %205 = arith.mulf %167, %204 : vector<8x64xf32>
    %206 = arith.truncf %205 : vector<8x64xf32> to vector<8x64xbf16>
    %c0_74 = arith.constant 0 : index
    %c0_75 = arith.constant 0 : index
    %c0_76 = arith.constant 0 : index
    %207 = vector.load %arg9[%c0_74, %c0_75, %c0_76] : memref<2x64x32xbf16, #tpu.memory_space<vmem>>, vector<1x64x32xbf16>
    %208 = vector.shape_cast %207 : vector<1x64x32xbf16> to vector<64x32xbf16>
    %cst_77 = arith.constant dense<0.000000e+00> : vector<8x32xf32>
    %209 = tpu.matmul %206, %208, %cst_77 {dimension_numbers = #tpu.dot_dimension_numbers<[1], [0], [0], [1], [0, 0, 1, 1], [], []>} : vector<8x64xbf16>, vector<64x32xbf16>, vector<8x32xf32> -> vector<8x32xf32>
    %210 = vector.extract_strided_slice %0 {offsets = [20, 0], sizes = [1, 32], strides = [1, 1]} : vector<22x32xf32> to vector<1x32xf32>
    %211 = vector.broadcast %210 : vector<1x32xf32> to vector<8x32xf32>
    %212 = arith.addf %209, %211 : vector<8x32xf32>
    %213 = arith.addf %130, %212 : vector<8x32xf32>
    %214 = vector.extract_strided_slice %0 {offsets = [14, 0], sizes = [1, 32], strides = [1, 1]} : vector<22x32xf32> to vector<1x32xf32>
    %215 = vector.extract_strided_slice %0 {offsets = [15, 0], sizes = [1, 32], strides = [1, 1]} : vector<22x32xf32> to vector<1x32xf32>
    %cst_78 = arith.constant dense<0.000000e+00> : vector<8xf32>
    %216 = vector.multi_reduction <add>, %213, %cst_78 [1] : vector<8x32xf32> to vector<8xf32>
    %217 = vector.shape_cast %216 : vector<8xf32> to vector<8x1xf32>
    %cst_79 = arith.constant 3.200000e+01 : f32
    %218 = vector.broadcast %cst_79 : f32 to vector<8x1xf32>
    %219 = arith.divf %217, %218 : vector<8x1xf32>
    %220 = arith.mulf %213, %213 : vector<8x32xf32>
    %cst_80 = arith.constant dense<0.000000e+00> : vector<8xf32>
    %221 = vector.multi_reduction <add>, %220, %cst_80 [1] : vector<8x32xf32> to vector<8xf32>
    %222 = vector.shape_cast %221 : vector<8xf32> to vector<8x1xf32>
    %cst_81 = arith.constant 3.200000e+01 : f32
    %223 = vector.broadcast %cst_81 : f32 to vector<8x1xf32>
    %224 = arith.divf %222, %223 : vector<8x1xf32>
    %225 = arith.mulf %219, %219 : vector<8x1xf32>
    %226 = arith.subf %224, %225 : vector<8x1xf32>
    %cst_82 = arith.constant 0.000000e+00 : f32
    %227 = vector.broadcast %cst_82 : f32 to vector<8x1xf32>
    %228 = arith.maximumf %226, %227 : vector<8x1xf32>
    %229 = vector.broadcast %219 : vector<8x1xf32> to vector<8x32xf32>
    %230 = arith.subf %213, %229 : vector<8x32xf32>
    %cst_83 = arith.constant 9.99999974E-6 : f32
    %231 = vector.broadcast %cst_83 : f32 to vector<8x1xf32>
    %232 = arith.addf %228, %231 : vector<8x1xf32>
    %233 = math.rsqrt %232 : vector<8x1xf32>
    %234 = vector.broadcast %233 : vector<8x1xf32> to vector<8x32xf32>
    %235 = arith.mulf %230, %234 : vector<8x32xf32>
    %236 = vector.broadcast %214 : vector<1x32xf32> to vector<8x32xf32>
    %237 = arith.mulf %235, %236 : vector<8x32xf32>
    %238 = vector.broadcast %215 : vector<1x32xf32> to vector<8x32xf32>
    %239 = arith.addf %237, %238 : vector<8x32xf32>
    %240 = arith.truncf %239 : vector<8x32xf32> to vector<8x32xbf16>
    %c1 = arith.constant 1 : index
    %c0_84 = arith.constant 0 : index
    %c0_85 = arith.constant 0 : index
    %241 = vector.load %arg4[%c1, %c0_84, %c0_85] : memref<2x32x64xbf16, #tpu.memory_space<vmem>>, vector<1x32x64xbf16>
    %242 = vector.shape_cast %241 : vector<1x32x64xbf16> to vector<32x64xbf16>
    %cst_86 = arith.constant dense<0.000000e+00> : vector<8x64xf32>
    %243 = tpu.matmul %240, %242, %cst_86 {dimension_numbers = #tpu.dot_dimension_numbers<[1], [0], [0], [1], [0, 0, 1, 1], [], []>} : vector<8x32xbf16>, vector<32x64xbf16>, vector<8x64xf32> -> vector<8x64xf32>
    %c1_87 = arith.constant 1 : index
    %c0_88 = arith.constant 0 : index
    %c0_89 = arith.constant 0 : index
    %244 = vector.load %arg5[%c1_87, %c0_88, %c0_89] : memref<2x32x64xbf16, #tpu.memory_space<vmem>>, vector<1x32x64xbf16>
    %245 = vector.shape_cast %244 : vector<1x32x64xbf16> to vector<32x64xbf16>
    %cst_90 = arith.constant dense<0.000000e+00> : vector<8x64xf32>
    %246 = tpu.matmul %240, %245, %cst_90 {dimension_numbers = #tpu.dot_dimension_numbers<[1], [0], [0], [1], [0, 0, 1, 1], [], []>} : vector<8x32xbf16>, vector<32x64xbf16>, vector<8x64xf32> -> vector<8x64xf32>
    %c1_91 = arith.constant 1 : index
    %c0_92 = arith.constant 0 : index
    %c0_93 = arith.constant 0 : index
    %247 = vector.load %arg6[%c1_91, %c0_92, %c0_93] : memref<2x32x64xbf16, #tpu.memory_space<vmem>>, vector<1x32x64xbf16>
    %248 = vector.shape_cast %247 : vector<1x32x64xbf16> to vector<32x64xbf16>
    %cst_94 = arith.constant dense<0.000000e+00> : vector<8x64xf32>
    %249 = tpu.matmul %240, %248, %cst_94 {dimension_numbers = #tpu.dot_dimension_numbers<[1], [0], [0], [1], [0, 0, 1, 1], [], []>} : vector<8x32xbf16>, vector<32x64xbf16>, vector<8x64xf32> -> vector<8x64xf32>
    %250 = tpu.concatenate %243, %243, %243, %243 in 0 : vector<8x64xf32>, vector<8x64xf32>, vector<8x64xf32>, vector<8x64xf32> -> vector<32x64xf32>
    %251 = arith.mulf %250, %4 : vector<32x64xf32>
    %cst_95 = arith.constant dense<0.000000e+00> : vector<32x8xf32>
    %252 = tpu.matmul %251, %246, %cst_95 {dimension_numbers = #tpu.dot_dimension_numbers<[1], [1], [0], [0], [0, 0, 1, 0], [], []>} : vector<32x64xf32>, vector<8x64xf32>, vector<32x8xf32> -> vector<32x8xf32>
    %253 = arith.addf %252, %3 : vector<32x8xf32>
    %cst_96 = arith.constant dense<0xFF800000> : vector<32xf32>
    %254 = vector.multi_reduction <maximumf>, %253, %cst_96 [1] : vector<32x8xf32> to vector<32xf32>
    %255 = vector.shape_cast %254 : vector<32xf32> to vector<32x1xf32>
    %256 = vector.broadcast %255 : vector<32x1xf32> to vector<32x8xf32>
    %257 = arith.subf %253, %256 : vector<32x8xf32>
    %258 = math.exp %257 : vector<32x8xf32>
    %cst_97 = arith.constant dense<0.000000e+00> : vector<32xf32>
    %259 = vector.multi_reduction <add>, %258, %cst_97 [1] : vector<32x8xf32> to vector<32xf32>
    %260 = vector.shape_cast %259 : vector<32xf32> to vector<32x1xf32>
    %261 = tpu.reciprocal %260 {approx = true} : vector<32x1xf32> -> vector<32x1xf32>
    %262 = vector.broadcast %261 : vector<32x1xf32> to vector<32x8xf32>
    %263 = arith.mulf %258, %262 : vector<32x8xf32>
    %cst_98 = arith.constant dense<0.000000e+00> : vector<32x64xf32>
    %264 = tpu.matmul %263, %249, %cst_98 {dimension_numbers = #tpu.dot_dimension_numbers<[1], [0], [0], [1], [0, 0, 1, 1], [], []>} : vector<32x8xf32>, vector<8x64xf32>, vector<32x64xf32> -> vector<32x64xf32>
    %265 = arith.mulf %264, %4 : vector<32x64xf32>
    %266 = arith.truncf %265 : vector<32x64xf32> to vector<32x64xbf16>
    %c1_99 = arith.constant 1 : index
    %c0_100 = arith.constant 0 : index
    %c0_101 = arith.constant 0 : index
    %267 = vector.load %arg7[%c1_99, %c0_100, %c0_101] : memref<2x64x32xbf16, #tpu.memory_space<vmem>>, vector<1x64x32xbf16>
    %268 = vector.shape_cast %267 : vector<1x64x32xbf16> to vector<64x32xbf16>
    %cst_102 = arith.constant dense<0.000000e+00> : vector<32x32xf32>
    %269 = tpu.matmul %266, %268, %cst_102 {dimension_numbers = #tpu.dot_dimension_numbers<[1], [0], [0], [1], [0, 0, 1, 1], [], []>} : vector<32x64xbf16>, vector<64x32xbf16>, vector<32x32xf32> -> vector<32x32xf32>
    %270 = vector.extract_strided_slice %269 {offsets = [0, 0], sizes = [8, 32], strides = [1, 1]} : vector<32x32xf32> to vector<8x32xf32>
    %271 = vector.extract_strided_slice %269 {offsets = [8, 0], sizes = [8, 32], strides = [1, 1]} : vector<32x32xf32> to vector<8x32xf32>
    %272 = arith.addf %270, %271 : vector<8x32xf32>
    %273 = vector.extract_strided_slice %269 {offsets = [16, 0], sizes = [8, 32], strides = [1, 1]} : vector<32x32xf32> to vector<8x32xf32>
    %274 = arith.addf %272, %273 : vector<8x32xf32>
    %275 = vector.extract_strided_slice %269 {offsets = [24, 0], sizes = [8, 32], strides = [1, 1]} : vector<32x32xf32> to vector<8x32xf32>
    %276 = arith.addf %274, %275 : vector<8x32xf32>
    %277 = arith.addf %213, %276 : vector<8x32xf32>
    %278 = vector.extract_strided_slice %0 {offsets = [18, 0], sizes = [1, 32], strides = [1, 1]} : vector<22x32xf32> to vector<1x32xf32>
    %279 = vector.extract_strided_slice %0 {offsets = [19, 0], sizes = [1, 32], strides = [1, 1]} : vector<22x32xf32> to vector<1x32xf32>
    %cst_103 = arith.constant dense<0.000000e+00> : vector<8xf32>
    %280 = vector.multi_reduction <add>, %277, %cst_103 [1] : vector<8x32xf32> to vector<8xf32>
    %281 = vector.shape_cast %280 : vector<8xf32> to vector<8x1xf32>
    %cst_104 = arith.constant 3.200000e+01 : f32
    %282 = vector.broadcast %cst_104 : f32 to vector<8x1xf32>
    %283 = arith.divf %281, %282 : vector<8x1xf32>
    %284 = arith.mulf %277, %277 : vector<8x32xf32>
    %cst_105 = arith.constant dense<0.000000e+00> : vector<8xf32>
    %285 = vector.multi_reduction <add>, %284, %cst_105 [1] : vector<8x32xf32> to vector<8xf32>
    %286 = vector.shape_cast %285 : vector<8xf32> to vector<8x1xf32>
    %cst_106 = arith.constant 3.200000e+01 : f32
    %287 = vector.broadcast %cst_106 : f32 to vector<8x1xf32>
    %288 = arith.divf %286, %287 : vector<8x1xf32>
    %289 = arith.mulf %283, %283 : vector<8x1xf32>
    %290 = arith.subf %288, %289 : vector<8x1xf32>
    %cst_107 = arith.constant 0.000000e+00 : f32
    %291 = vector.broadcast %cst_107 : f32 to vector<8x1xf32>
    %292 = arith.maximumf %290, %291 : vector<8x1xf32>
    %293 = vector.broadcast %283 : vector<8x1xf32> to vector<8x32xf32>
    %294 = arith.subf %277, %293 : vector<8x32xf32>
    %cst_108 = arith.constant 9.99999974E-6 : f32
    %295 = vector.broadcast %cst_108 : f32 to vector<8x1xf32>
    %296 = arith.addf %292, %295 : vector<8x1xf32>
    %297 = math.rsqrt %296 : vector<8x1xf32>
    %298 = vector.broadcast %297 : vector<8x1xf32> to vector<8x32xf32>
    %299 = arith.mulf %294, %298 : vector<8x32xf32>
    %300 = vector.broadcast %278 : vector<1x32xf32> to vector<8x32xf32>
    %301 = arith.mulf %299, %300 : vector<8x32xf32>
    %302 = vector.broadcast %279 : vector<1x32xf32> to vector<8x32xf32>
    %303 = arith.addf %301, %302 : vector<8x32xf32>
    %c1_109 = arith.constant 1 : index
    %c0_110 = arith.constant 0 : index
    %c0_111 = arith.constant 0 : index
    %304 = vector.load %arg8[%c1_109, %c0_110, %c0_111] : memref<2x33x64xbf16, #tpu.memory_space<vmem>>, vector<1x33x64xbf16>
    %305 = vector.shape_cast %304 : vector<1x33x64xbf16> to vector<33x64xbf16>
    %306 = arith.truncf %303 : vector<8x32xf32> to vector<8x32xbf16>
    %307 = vector.extract_strided_slice %305 {offsets = [0, 0], sizes = [32, 64], strides = [1, 1]} : vector<33x64xbf16> to vector<32x64xbf16>
    %cst_112 = arith.constant dense<0.000000e+00> : vector<8x64xf32>
    %308 = tpu.matmul %306, %307, %cst_112 {dimension_numbers = #tpu.dot_dimension_numbers<[1], [0], [0], [1], [0, 0, 1, 1], [], []>} : vector<8x32xbf16>, vector<32x64xbf16>, vector<8x64xf32> -> vector<8x64xf32>
    %309 = vector.extract_strided_slice %305 {offsets = [32, 0], sizes = [1, 64], strides = [1, 1]} : vector<33x64xbf16> to vector<1x64xbf16>
    %310 = arith.extf %309 : vector<1x64xbf16> to vector<1x64xf32>
    %311 = vector.broadcast %310 : vector<1x64xf32> to vector<8x64xf32>
    %312 = arith.addf %308, %311 : vector<8x64xf32>
    %cst_113 = arith.constant 5.000000e-01 : f32
    %313 = vector.broadcast %cst_113 : f32 to vector<8x64xf32>
    %314 = arith.mulf %313, %312 : vector<8x64xf32>
    %cst_114 = arith.constant 0.707106769 : f32
    %315 = vector.broadcast %cst_114 : f32 to vector<8x64xf32>
    %316 = arith.mulf %312, %315 : vector<8x64xf32>
    %317 = math.absf %316 : vector<8x64xf32>
    %cst_115 = arith.constant 0.327591091 : f32
    %318 = vector.broadcast %cst_115 : f32 to vector<8x64xf32>
    %319 = arith.mulf %318, %317 : vector<8x64xf32>
    %cst_116 = arith.constant 1.000000e+00 : f32
    %320 = vector.broadcast %cst_116 : f32 to vector<8x64xf32>
    %321 = arith.addf %320, %319 : vector<8x64xf32>
    %cst_117 = arith.constant 1.000000e+00 : f32
    %322 = vector.broadcast %cst_117 : f32 to vector<8x64xf32>
    %323 = arith.divf %322, %321 : vector<8x64xf32>
    %cst_118 = arith.constant 1.06140542 : f32
    %324 = vector.broadcast %cst_118 : f32 to vector<8x64xf32>
    %325 = arith.mulf %324, %323 : vector<8x64xf32>
    %cst_119 = arith.constant -1.45315206 : f32
    %326 = vector.broadcast %cst_119 : f32 to vector<8x64xf32>
    %327 = arith.addf %325, %326 : vector<8x64xf32>
    %328 = arith.mulf %327, %323 : vector<8x64xf32>
    %cst_120 = arith.constant 1.42141378 : f32
    %329 = vector.broadcast %cst_120 : f32 to vector<8x64xf32>
    %330 = arith.addf %328, %329 : vector<8x64xf32>
    %331 = arith.mulf %330, %323 : vector<8x64xf32>
    %cst_121 = arith.constant -0.284496725 : f32
    %332 = vector.broadcast %cst_121 : f32 to vector<8x64xf32>
    %333 = arith.addf %331, %332 : vector<8x64xf32>
    %334 = arith.mulf %333, %323 : vector<8x64xf32>
    %cst_122 = arith.constant 0.254829586 : f32
    %335 = vector.broadcast %cst_122 : f32 to vector<8x64xf32>
    %336 = arith.addf %334, %335 : vector<8x64xf32>
    %337 = arith.mulf %336, %323 : vector<8x64xf32>
    %cst_123 = arith.constant 0.000000e+00 : f32
    %338 = vector.broadcast %cst_123 : f32 to vector<8x64xf32>
    %339 = arith.subf %338, %317 : vector<8x64xf32>
    %340 = arith.mulf %339, %317 : vector<8x64xf32>
    %341 = math.exp %340 : vector<8x64xf32>
    %342 = arith.mulf %337, %341 : vector<8x64xf32>
    %cst_124 = arith.constant 1.000000e+00 : f32
    %343 = vector.broadcast %cst_124 : f32 to vector<8x64xf32>
    %344 = arith.subf %343, %342 : vector<8x64xf32>
    %cst_125 = arith.constant 0.000000e+00 : f32
    %345 = vector.broadcast %cst_125 : f32 to vector<8x64xf32>
    %346 = arith.cmpf olt, %316, %345 : vector<8x64xf32>
    %cst_126 = arith.constant 0.000000e+00 : f32
    %347 = vector.broadcast %cst_126 : f32 to vector<8x64xf32>
    %348 = arith.subf %347, %344 : vector<8x64xf32>
    %349 = arith.select %346, %348, %344 : vector<8x64xi1>, vector<8x64xf32>
    %cst_127 = arith.constant 1.000000e+00 : f32
    %350 = vector.broadcast %cst_127 : f32 to vector<8x64xf32>
    %351 = arith.addf %350, %349 : vector<8x64xf32>
    %352 = arith.mulf %314, %351 : vector<8x64xf32>
    %353 = arith.truncf %352 : vector<8x64xf32> to vector<8x64xbf16>
    %c1_128 = arith.constant 1 : index
    %c0_129 = arith.constant 0 : index
    %c0_130 = arith.constant 0 : index
    %354 = vector.load %arg9[%c1_128, %c0_129, %c0_130] : memref<2x64x32xbf16, #tpu.memory_space<vmem>>, vector<1x64x32xbf16>
    %355 = vector.shape_cast %354 : vector<1x64x32xbf16> to vector<64x32xbf16>
    %cst_131 = arith.constant dense<0.000000e+00> : vector<8x32xf32>
    %356 = tpu.matmul %353, %355, %cst_131 {dimension_numbers = #tpu.dot_dimension_numbers<[1], [0], [0], [1], [0, 0, 1, 1], [], []>} : vector<8x64xbf16>, vector<64x32xbf16>, vector<8x32xf32> -> vector<8x32xf32>
    %357 = vector.extract_strided_slice %0 {offsets = [21, 0], sizes = [1, 32], strides = [1, 1]} : vector<22x32xf32> to vector<1x32xf32>
    %358 = vector.broadcast %357 : vector<1x32xf32> to vector<8x32xf32>
    %359 = arith.addf %356, %358 : vector<8x32xf32>
    %360 = arith.addf %277, %359 : vector<8x32xf32>
    %361 = vector.extract_strided_slice %0 {offsets = [2, 0], sizes = [1, 32], strides = [1, 1]} : vector<22x32xf32> to vector<1x32xf32>
    %362 = vector.extract_strided_slice %0 {offsets = [3, 0], sizes = [1, 32], strides = [1, 1]} : vector<22x32xf32> to vector<1x32xf32>
    %cst_132 = arith.constant dense<0.000000e+00> : vector<8xf32>
    %363 = vector.multi_reduction <add>, %360, %cst_132 [1] : vector<8x32xf32> to vector<8xf32>
    %364 = vector.shape_cast %363 : vector<8xf32> to vector<8x1xf32>
    %cst_133 = arith.constant 3.200000e+01 : f32
    %365 = vector.broadcast %cst_133 : f32 to vector<8x1xf32>
    %366 = arith.divf %364, %365 : vector<8x1xf32>
    %367 = arith.mulf %360, %360 : vector<8x32xf32>
    %cst_134 = arith.constant dense<0.000000e+00> : vector<8xf32>
    %368 = vector.multi_reduction <add>, %367, %cst_134 [1] : vector<8x32xf32> to vector<8xf32>
    %369 = vector.shape_cast %368 : vector<8xf32> to vector<8x1xf32>
    %cst_135 = arith.constant 3.200000e+01 : f32
    %370 = vector.broadcast %cst_135 : f32 to vector<8x1xf32>
    %371 = arith.divf %369, %370 : vector<8x1xf32>
    %372 = arith.mulf %366, %366 : vector<8x1xf32>
    %373 = arith.subf %371, %372 : vector<8x1xf32>
    %cst_136 = arith.constant 0.000000e+00 : f32
    %374 = vector.broadcast %cst_136 : f32 to vector<8x1xf32>
    %375 = arith.maximumf %373, %374 : vector<8x1xf32>
    %376 = vector.broadcast %366 : vector<8x1xf32> to vector<8x32xf32>
    %377 = arith.subf %360, %376 : vector<8x32xf32>
    %cst_137 = arith.constant 9.99999974E-6 : f32
    %378 = vector.broadcast %cst_137 : f32 to vector<8x1xf32>
    %379 = arith.addf %375, %378 : vector<8x1xf32>
    %380 = math.rsqrt %379 : vector<8x1xf32>
    %381 = vector.broadcast %380 : vector<8x1xf32> to vector<8x32xf32>
    %382 = arith.mulf %377, %381 : vector<8x32xf32>
    %383 = vector.broadcast %361 : vector<1x32xf32> to vector<8x32xf32>
    %384 = arith.mulf %382, %383 : vector<8x32xf32>
    %385 = vector.broadcast %362 : vector<1x32xf32> to vector<8x32xf32>
    %386 = arith.addf %384, %385 : vector<8x32xf32>
    %c0_138 = arith.constant 0 : index
    %c0_139 = arith.constant 0 : index
    %387 = vector.load %arg13[%c0_138, %c0_139] : memref<8x8xbf16, #tpu.memory_space<vmem>>, vector<8x8xbf16>
    %388 = arith.truncf %386 : vector<8x32xf32> to vector<8x32xbf16>
    %cst_140 = arith.constant dense<0.000000e+00> : vector<8x32xf32>
    %389 = tpu.matmul %387, %388, %cst_140 {dimension_numbers = #tpu.dot_dimension_numbers<[1], [0], [0], [1], [0, 0, 1, 1], [], []>} : vector<8x8xbf16>, vector<8x32xbf16>, vector<8x32xf32> -> vector<8x32xf32>
    %c0_141 = arith.constant 0 : index
    %c0_142 = arith.constant 0 : index
    %390 = vector.load %arg10[%c0_141, %c0_142] : memref<33x128xbf16, #tpu.memory_space<vmem>>, vector<33x128xbf16>
    %391 = arith.truncf %389 : vector<8x32xf32> to vector<8x32xbf16>
    %392 = vector.extract_strided_slice %390 {offsets = [0, 0], sizes = [32, 128], strides = [1, 1]} : vector<33x128xbf16> to vector<32x128xbf16>
    %cst_143 = arith.constant dense<0.000000e+00> : vector<8x128xf32>
    %393 = tpu.matmul %391, %392, %cst_143 {dimension_numbers = #tpu.dot_dimension_numbers<[1], [0], [0], [1], [0, 0, 1, 1], [], []>} : vector<8x32xbf16>, vector<32x128xbf16>, vector<8x128xf32> -> vector<8x128xf32>
    %394 = vector.extract_strided_slice %390 {offsets = [32, 0], sizes = [1, 128], strides = [1, 1]} : vector<33x128xbf16> to vector<1x128xbf16>
    %395 = arith.extf %394 : vector<1x128xbf16> to vector<1x128xf32>
    %396 = vector.broadcast %395 : vector<1x128xf32> to vector<8x128xf32>
    %397 = arith.addf %393, %396 : vector<8x128xf32>
    %c0_144 = arith.constant 0 : index
    %c0_145 = arith.constant 0 : index
    %398 = vector.load %arg14[%c0_144, %c0_145] : memref<8x128xf32, #tpu.memory_space<vmem>>, vector<8x128xf32>
    tpu.vector_store %arg14[%c0_144, %c0_145], %397 {strides = array<i32>} : memref<8x128xf32, #tpu.memory_space<vmem>>, vector<8x128xf32>,
    return
  }
}

</mosaic_0001>

<llo_original>
// kernel: vit_forward.1
$region0: #{vit_forward.1}
  #allocation0 [shape = 'u32[]', space=smem, size = 0x4, offset = 0x4, fixed_abs, tag = 'smem constant byte address 0x4 - core index']
  #allocation1 [shape = 'u32[72,128]{1,0:T(1,128)}', space=vmem, size = 0x9000, scoped, tag = 'internal scratch']
  %s0 = inlined_call_operand.vmem [shape: f32[8,192], index: 0, kind: input, shape index: {}]
  %s1 = inlined_call_operand.vmem [shape: f32[2,192], index: 1, kind: input, shape index: {}]
  %s2 = inlined_call_operand.vmem [shape: bf16[193,32], index: 2, kind: input, shape index: {}]
  %s3 = inlined_call_operand.vmem [shape: f32[22,32], index: 3, kind: input, shape index: {}]
  %s4 = inlined_call_operand.vmem [shape: bf16[2,32,64], index: 4, kind: input, shape index: {}]
  %s5 = inlined_call_operand.vmem [shape: bf16[2,32,64], index: 5, kind: input, shape index: {}]
  %s6 = inlined_call_operand.vmem [shape: bf16[2,32,64], index: 6, kind: input, shape index: {}]
  %s7 = inlined_call_operand.vmem [shape: bf16[2,64,32], index: 7, kind: input, shape index: {}]
  %s8 = inlined_call_operand.vmem [shape: bf16[2,33,64], index: 8, kind: input, shape index: {}]
  %s9 = inlined_call_operand.vmem [shape: bf16[2,64,32], index: 9, kind: input, shape index: {}]
  %s10 = inlined_call_operand.vmem [shape: bf16[33,128], index: 10, kind: input, shape index: {}]
  %s11 = inlined_call_operand.vmem [shape: f32[32,8], index: 11, kind: input, shape index: {}]
  %s12 = inlined_call_operand.vmem [shape: f32[32,64], index: 12, kind: input, shape index: {}]
  %s13 = inlined_call_operand.vmem [shape: bf16[8,8], index: 13, kind: input, shape index: {}]
  %s14 = inlined_call_operand.vmem [shape: f32[8,128], index: 14, kind: output, shape index: {}]
  %s15 = sld [smem:[#allocation0]]
  $region66: #{vit_forward.1} parent=0
    _
  %s17 = ssub.s32 1, %s15
  %s18 = scalar_select 0, %s17, %s15
  // Predicated region
  $region2: #{vit_forward.1} parent=0 // pred_check
    _
  $region3: #{vit_forward.1} parent=0 // pred_check_branch
    %20 = sbr.rel (0) target = $region5
  $region4: #{vit_forward.1} parent=0 // pred_region
    _
  $region5: #{vit_forward.1} parent=0 // pred_fallthru
    _
  // Predicated region
  $region6: #{vit_forward.1} parent=0 // pred_check
    _
  $region7: #{vit_forward.1} parent=0 // pred_check_branch
    %22 = sbr.rel (0) target = $region9
  $region8: #{vit_forward.1} parent=0 // pred_region
    _
  $region9: #{vit_forward.1} parent=0 // pred_fallthru
    _
  // Predicated region
  $region10: #{vit_forward.1} parent=0 // pred_check
    _
  $region11: #{vit_forward.1} parent=0 // pred_check_branch
    %24 = sbr.rel (0) target = $region13
  $region12: #{vit_forward.1} parent=0 // pred_region
    _
  $region13: #{vit_forward.1} parent=0 // pred_fallthru
    _
  // Predicated region
  $region14: #{vit_forward.1} parent=0 // pred_check
    _
  $region15: #{vit_forward.1} parent=0 // pred_check_branch
    %26 = sbr.rel (0) target = $region17
  $region16: #{vit_forward.1} parent=0 // pred_region
    _
  $region17: #{vit_forward.1} parent=0 // pred_fallthru
    _
  // Predicated region
  $region18: #{vit_forward.1} parent=0 // pred_check
    _
  $region19: #{vit_forward.1} parent=0 // pred_check_branch
    %28 = sbr.rel (0) target = $region21
  $region20: #{vit_forward.1} parent=0 // pred_region
    _
  $region21: #{vit_forward.1} parent=0 // pred_fallthru
    _
  // Predicated region
  $region22: #{vit_forward.1} parent=0 // pred_check
    _
  $region23: #{vit_forward.1} parent=0 // pred_check_branch
    %30 = sbr.rel (0) target = $region25
  $region24: #{vit_forward.1} parent=0 // pred_region
    _
  $region25: #{vit_forward.1} parent=0 // pred_fallthru
    _
  // Predicated region
  $region26: #{vit_forward.1} parent=0 // pred_check
    _
  $region27: #{vit_forward.1} parent=0 // pred_check_branch
    %32 = sbr.rel (0) target = $region29
  $region28: #{vit_forward.1} parent=0 // pred_region
    _
  $region29: #{vit_forward.1} parent=0 // pred_fallthru
    _
  // Predicated region
  $region30: #{vit_forward.1} parent=0 // pred_check
    _
  $region31: #{vit_forward.1} parent=0 // pred_check_branch
    %34 = sbr.rel (0) target = $region33
  $region32: #{vit_forward.1} parent=0 // pred_region
    _
  $region33: #{vit_forward.1} parent=0 // pred_fallthru
    _
  // Predicated region
  $region34: #{vit_forward.1} parent=0 // pred_check
    _
  $region35: #{vit_forward.1} parent=0 // pred_check_branch
    %36 = sbr.rel (0) target = $region37
  $region36: #{vit_forward.1} parent=0 // pred_region
    _
  $region37: #{vit_forward.1} parent=0 // pred_fallthru
    _
  // Predicated region
  $region38: #{vit_forward.1} parent=0 // pred_check
    _
  $region39: #{vit_forward.1} parent=0 // pred_check_branch
    %38 = sbr.rel (0) target = $region41
  $region40: #{vit_forward.1} parent=0 // pred_region
    _
  $region41: #{vit_forward.1} parent=0 // pred_fallthru
    _
  // Predicated region
  $region42: #{vit_forward.1} parent=0 // pred_check
    _
  $region43: #{vit_forward.1} parent=0 // pred_check_branch
    %40 = sbr.rel (0) target = $region45
  $region44: #{vit_forward.1} parent=0 // pred_region
    _
  $region45: #{vit_forward.1} parent=0 // pred_fallthru
    _
  // Predicated region
  $region46: #{vit_forward.1} parent=0 // pred_check
    _
  $region47: #{vit_forward.1} parent=0 // pred_check_branch
    %42 = sbr.rel (0) target = $region49
  $region48: #{vit_forward.1} parent=0 // pred_region
    _
  $region49: #{vit_forward.1} parent=0 // pred_fallthru
    _
  // Predicated region
  $region50: #{vit_forward.1} parent=0 // pred_check
    _
  $region51: #{vit_forward.1} parent=0 // pred_check_branch
    %44 = sbr.rel (0) target = $region53
  $region52: #{vit_forward.1} parent=0 // pred_region
    _
  $region53: #{vit_forward.1} parent=0 // pred_fallthru
    _
  // Predicated region
  $region54: #{vit_forward.1} parent=0 // pred_check
    _
  $region55: #{vit_forward.1} parent=0 // pred_check_branch
    %46 = sbr.rel (0) target = $region57
  $region56: #{vit_forward.1} parent=0 // pred_region
    _
  $region57: #{vit_forward.1} parent=0 // pred_fallthru
    _
  %v48 = vld [vmem:[%s3] sm:$0xff]
  %v49 = vld [vmem:[%s3 + $0x8] sm:$0xff]
  %v50 = vld [vmem:[%s3 + $0x10] sm:$0x3f]
  %v51 = vld [vmem:[%s1] sm:$0xf]
  %v52 = vld [vmem:[%s2] sm:$0xf]
  %v53 = vld [vmem:[%s2 + $0x4] sm:$0xf]
  %v54 = vld [vmem:[%s2 + $0x8] sm:$0xf]
  %v55 = vld [vmem:[%s2 + $0xc] sm:$0xf]
  %v56 = vld [vmem:[%s2 + $0x10] sm:$0xf]
  %v57 = vld [vmem:[%s2 + $0x14] sm:$0xf]
  %v58 = vld [vmem:[%s2 + $0x18] sm:$0xf]
  %v59 = vld [vmem:[%s2 + $0x1c] sm:$0xf]
  %v60 = vld [vmem:[%s2 + $0x20] sm:$0xf]
  %v61 = vld [vmem:[%s2 + $0x24] sm:$0xf]
  %v62 = vld [vmem:[%s2 + $0x28] sm:$0xf]
  %v63 = vld [vmem:[%s2 + $0x2c] sm:$0xf]
  %v64 = vld [vmem:[%s2 + $0x30] sm:$0xf]
  %v65 = vld [vmem:[%s2 + $0x34] sm:$0xf]
  %v66 = vld [vmem:[%s2 + $0x38] sm:$0xf]
  %v67 = vld [vmem:[%s2 + $0x3c] sm:$0xf]
  %v68 = vld [vmem:[%s2 + $0x40] sm:$0xf]
  %v69 = vld [vmem:[%s2 + $0x44] sm:$0xf]
  %v70 = vld [vmem:[%s2 + $0x48] sm:$0xf]
  %v71 = vld [vmem:[%s2 + $0x4c] sm:$0xf]
  %v72 = vld [vmem:[%s2 + $0x50] sm:$0xf]
  %v73 = vld [vmem:[%s2 + $0x54] sm:$0xf]
  %v74 = vld [vmem:[%s2 + $0x58] sm:$0xf]
  %v75 = vld [vmem:[%s2 + $0x5c] sm:$0xf]
  %v76 = vld [vmem:[%s2 + $0x60] sm:$0x1]
  %v77 = vld [vmem:[%s11] sm:$0xff]
  %v78 = vld [vmem:[%s11 + $0x8] sm:$0xff]
  %v79 = vld [vmem:[%s11 + $0x10] sm:$0xff]
  %v80 = vld [vmem:[%s11 + $0x18] sm:$0xff]
  %v81 = vld [vmem:[%s12] sm:$0xff]
  %v82 = vld [vmem:[%s12 + $0x8] sm:$0xff]
  %v83 = vld [vmem:[%s12 + $0x10] sm:$0xff]
  %v84 = vld [vmem:[%s12 + $0x18] sm:$0xff]
  %v85 = vld [vmem:[%s0] sm:$0xff]
  %v86 = vld [vmem:[%s0 + $0x8] sm:$0xff]
  %vm87 = vcmask 523264
  %v88 = vsel %vm87, %v86, 0.0
  %v89 = vadd.f32 %v85, %v88
  %90 = vadd.xlane.f32.xlu0 %v89
  %v91 = vpop.xlane.xlu0 %90
  %v92 = vrcp.pop 192.0
  %v93 = vmul.f32 192.0, %v92
  %v94 = vsub.f32 1.0, %v93
  %v95 = vmul.f32 %v92, %v94
  %v96 = vadd.f32 %v92, %v95
  %vm97 = vweird.f32 %v92
  %v98 = vsel %vm97, %v92, %v96
  %v99 = vmul.f32 %v91, %v98
  %v100 = vmul.f32 %v85, %v85
  %v101 = vmul.f32 %v86, %v86
  %v102 = vsel %vm87, %v101, 0.0
  %v103 = vadd.f32 %v100, %v102
  %104 = vadd.xlane.f32.xlu0 %v103
  %v105 = vpop.xlane.xlu0 %104
  %v106 = vmul.f32 %v105, %v98
  %v107 = vmul.f32 %v99, %v99
  %v108 = vsub.f32 %v106, %v107
  %v109 = vmax.f32 %v108, 0.0
  %v110 = vsub.f32 %v85, %v99
  %v111 = vsub.f32 %v86, %v99
  %v112 = vadd.f32 %v109, 1e-05
  %v113 = vrsqrt.pop %v112
  %v114 = vmul.f32 %v113, %v112
  %v115 = vmul.f32 %v114, %v113
  %v116 = vmul.f32 0.5, %v115
  %v117 = vsub.f32 1.5, %v116
  %v118 = vmul.f32 %v113, %v117
  %vm119 = vweird.f32 %v112
  %vm120 = vweird.f32 %v113
  %vm121 = vmor %vm119, %vm120
  %v122 = vsel %vm121, %v113, %v118
  %v123 = vmul.f32 %v110, %v122
  %v124 = vmul.f32 %v111, %v122
  %v126 = vperm.slane %v51, 0
  %v127 = vperm.slane %v51, 2
  %v130 = vperm.slane %v126, 0
  %v131 = vperm.slane %v127, 0
  %v132 = vmul.f32 %v123, %v130
  %v133 = vmul.f32 %v124, %v131
  %v134 = vperm.slane %v51, 1
  %v135 = vperm.slane %v51, 3
  %v138 = vperm.slane %v134, 1
  %v139 = vperm.slane %v135, 1
  %v140 = vadd.f32 %v132, %v138
  %v141 = vadd.f32 %v133, %v139
  %v142 = vpack.c.bf16 %v140, %v140
  %v143 = vpack.c.bf16 %v141, %v141
  %v144 = vunpack.c.l.bf16 %v76
  %v145 = vperm.slane %v144, 0
  %v170 = vunpack.c.l.b16 %v52
  %v171 = vunpack.c.l.b16 %v53
  %v172 = vunpack.c.l.b16 %v54
  %v173 = vunpack.c.l.b16 %v55
  %v174 = vunpack.c.l.b16 %v56
  %v175 = vunpack.c.l.b16 %v57
  %v176 = vunpack.c.l.b16 %v58
  %v177 = vunpack.c.l.b16 %v59
  %v178 = vunpack.c.l.b16 %v60
  %v179 = vunpack.c.l.b16 %v61
  %v180 = vunpack.c.l.b16 %v62
  %v181 = vunpack.c.l.b16 %v63
  %v182 = vunpack.c.l.b16 %v64
  %v183 = vunpack.c.l.b16 %v65
  %v184 = vunpack.c.l.b16 %v66
  %v185 = vunpack.c.l.b16 %v67
  %v186 = vunpack.c.l.b16 %v68
  %v187 = vunpack.c.l.b16 %v69
  %v188 = vunpack.c.l.b16 %v70
  %v189 = vunpack.c.l.b16 %v71
  %v190 = vunpack.c.l.b16 %v72
  %v191 = vunpack.c.l.b16 %v73
  %v192 = vunpack.c.l.b16 %v74
  %v193 = vunpack.c.l.b16 %v75
  %v194 = vpack.c.b16 %v171, %v170
  %v195 = vpack.c.b16 %v173, %v172
  %v196 = vpack.c.b16 %v175, %v174
  %v197 = vpack.c.b16 %v177, %v176
  %v198 = vpack.c.b16 %v179, %v178
  %v199 = vpack.c.b16 %v181, %v180
  %v200 = vpack.c.b16 %v183, %v182
  %v201 = vpack.c.b16 %v185, %v184
  %v202 = vpack.c.b16 %v187, %v186
  %v203 = vpack.c.b16 %v189, %v188
  %v204 = vpack.c.b16 %v191, %v190
  %v205 = vpack.c.b16 %v193, %v192
  %v219 = vsel %vm87, %v143, 0
  %221 = vmatpush.bf16.msra.mxu0 %v201
  %222 = vmatpush.bf16.msra.mxu0 %v200
  %223 = vmatpush.bf16.msra.mxu0 %v199
  %224 = vmatpush.bf16.msra.mxu0 %v198
  %225 = vmatpush.bf16.msra.mxu0 %v197
  %226 = vmatpush.bf16.msra.mxu0 %v196
  %227 = vmatpush.bf16.msra.mxu0 %v195
  %228 = vmatpush.bf16.msra.mxu0 %v194
  %229 = vmatmul.bf16.gmra.mxu0 %v142
  %v230 = vpop.f32.mrf.mxu0
  %v231 = vadd.f32 %v145, %v230
  %v232 = vpop.f32.mrf.mxu0
  %233 = vdwg.mxu0
  %234 = vmatpush.bf16.msra.mxu0 0
  %235 = vmatpush.bf16.msra.mxu0 0
  %236 = vmatpush.bf16.msra.mxu0 0
  %237 = vmatpush.bf16.msra.mxu0 0
  %238 = vmatpush.bf16.msra.mxu0 %v205
  %239 = vmatpush.bf16.msra.mxu0 %v204
  %240 = vmatpush.bf16.msra.mxu0 %v203
  %241 = vmatpush.bf16.msra.mxu0 %v202
  %242 = vmatmul.bf16.gmra.mxu0 %v219
  %v243 = vpop.f32.mrf.mxu0
  %v244 = vadd.f32 %v231, %v243
  %v245 = vpop.f32.mrf.mxu0
  %246 = vdwg.mxu0
  %vm247 = vcmask 261120
  %v248 = vsel %vm247, %v244, 0.0
  %249 = vadd.xlane.f32.xlu0 %v248
  %v250 = vpop.xlane.xlu0 %249
  %v251 = vrcp.pop 32.0
  %v252 = vmul.f32 32.0, %v251
  %v253 = vsub.f32 1.0, %v252
  %v254 = vmul.f32 %v251, %v253
  %v255 = vadd.f32 %v251, %v254
  %vm256 = vweird.f32 %v251
  %v257 = vsel %vm256, %v251, %v255
  %v258 = vmul.f32 %v250, %v257
  %v259 = vmul.f32 %v244, %v244
  %v260 = vsel %vm247, %v259, 0.0
  %261 = vadd.xlane.f32.xlu0 %v260
  %v262 = vpop.xlane.xlu0 %261
  %v263 = vmul.f32 %v262, %v257
  %v264 = vmul.f32 %v258, %v258
  %v265 = vsub.f32 %v263, %v264
  %v266 = vmax.f32 %v265, 0.0
  %v267 = vsub.f32 %v244, %v258
  %v268 = vadd.f32 %v266, 1e-05
  %v269 = vrsqrt.pop %v268
  %v270 = vmul.f32 %v269, %v268
  %v271 = vmul.f32 %v270, %v269
  %v272 = vmul.f32 0.5, %v271
  %v273 = vsub.f32 1.5, %v272
  %v274 = vmul.f32 %v269, %v273
  %vm275 = vweird.f32 %v268
  %vm276 = vweird.f32 %v269
  %vm277 = vmor %vm275, %vm276
  %v278 = vsel %vm277, %v269, %v274
  %v279 = vmul.f32 %v267, %v278
  %v280 = vperm.slane %v48, 0
  %v281 = vmul.f32 %v279, %v280
  %v282 = vperm.slane %v48, 1
  %v283 = vadd.f32 %v281, %v282
  %vm286 = vcmask 1043456
  %v287 = vrot.slane %v48, 4
  %v288 = vrot.slane %v49, 4
  %v289 = vsel %vm286, %v287, %v288
  %v291 = vadd.f32 %v283, %v289
  %v292 = vsel %vm247, %v291, 0.0
  %293 = vadd.xlane.f32.xlu0 %v292
  %v294 = vpop.xlane.xlu0 %293
  %v295 = vmul.f32 %v294, %v257
  %v296 = vmul.f32 %v291, %v291
  %v297 = vsel %vm247, %v296, 0.0
  %298 = vadd.xlane.f32.xlu0 %v297
  %v299 = vpop.xlane.xlu0 %298
  %v300 = vmul.f32 %v299, %v257
  %v301 = vmul.f32 %v295, %v295
  %v302 = vsub.f32 %v300, %v301
  %v303 = vmax.f32 %v302, 0.0
  %v304 = vsub.f32 %v291, %v295
  %v305 = vadd.f32 %v303, 1e-05
  %v306 = vrsqrt.pop %v305
  %v307 = vmul.f32 %v306, %v305
  %v308 = vmul.f32 %v307, %v306
  %v309 = vmul.f32 0.5, %v308
  %v310 = vsub.f32 1.5, %v309
  %v311 = vmul.f32 %v306, %v310
  %vm312 = vweird.f32 %v305
  %vm313 = vweird.f32 %v306
  %vm314 = vmor %vm312, %vm313
  %v315 = vsel %vm314, %v306, %v311
  %v316 = vmul.f32 %v304, %v315
  %v317 = vperm.slane %v49, 4
  %v318 = vmul.f32 %v316, %v317
  %v319 = vperm.slane %v49, 5
  %v320 = vadd.f32 %v318, %v319
  %v321 = vpack.c.bf16 %v320, %v320
  %v322 = vld [vmem:[%s4] sm:$0xf]
  %v323 = vld [vmem:[%s4 + $0x4] sm:$0xf]
  %v324 = vld [vmem:[%s4 + $0x8] sm:$0xf]
  %v325 = vld [vmem:[%s4 + $0xc] sm:$0xf]
  %v330 = vunpack.c.l.b16 %v322
  %v331 = vunpack.c.l.b16 %v323
  %v332 = vunpack.c.l.b16 %v324
  %v333 = vunpack.c.l.b16 %v325
  %v334 = vpack.c.b16 %v331, %v330
  %v335 = vpack.c.b16 %v333, %v332
  %v339 = vsel %vm247, %v321, 0
  %341 = vmatpush.bf16.msra.mxu0 0
  %342 = vmatpush.bf16.msra.mxu0 0
  %343 = vmatpush.bf16.msra.mxu0 0
  %344 = vmatpush.bf16.msra.mxu0 0
  %345 = vmatpush.bf16.msra.mxu0 0
  %346 = vmatpush.bf16.msra.mxu0 0
  %347 = vmatpush.bf16.msra.mxu0 %v335
  %348 = vmatpush.bf16.msra.mxu0 %v334
  %349 = vmatmul.bf16.gmra.mxu0 %v339
  %v350 = vpop.f32.mrf.mxu0
  %v351 = vadd.f32 0.0, %v350
  %v352 = vpop.f32.mrf.mxu0
  %353 = vdwg.mxu0
  %v354 = vld [vmem:[%s5] sm:$0xf]
  %v355 = vld [vmem:[%s5 + $0x4] sm:$0xf]
  %v356 = vld [vmem:[%s5 + $0x8] sm:$0xf]
  %v357 = vld [vmem:[%s5 + $0xc] sm:$0xf]
  %v362 = vunpack.c.l.b16 %v354
  %v363 = vunpack.c.l.b16 %v355
  %v364 = vunpack.c.l.b16 %v356
  %v365 = vunpack.c.l.b16 %v357
  %v366 = vpack.c.b16 %v363, %v362
  %v367 = vpack.c.b16 %v365, %v364
  %370 = vmatpush.bf16.msra.mxu0 0
  %371 = vmatpush.bf16.msra.mxu0 0
  %372 = vmatpush.bf16.msra.mxu0 0
  %373 = vmatpush.bf16.msra.mxu0 0
  %374 = vmatpush.bf16.msra.mxu0 0
  %375 = vmatpush.bf16.msra.mxu0 0
  %376 = vmatpush.bf16.msra.mxu0 %v367
  %377 = vmatpush.bf16.msra.mxu0 %v366
  %378 = vmatmul.bf16.gmra.mxu0 %v339
  %v379 = vpop.f32.mrf.mxu0
  %v380 = vadd.f32 0.0, %v379
  %v381 = vpop.f32.mrf.mxu0
  %382 = vdwg.mxu0
  %v383 = vld [vmem:[%s6] sm:$0xf]
  %v384 = vld [vmem:[%s6 + $0x4] sm:$0xf]
  %v385 = vld [vmem:[%s6 + $0x8] sm:$0xf]
  %v386 = vld [vmem:[%s6 + $0xc] sm:$0xf]
  %v391 = vunpack.c.l.b16 %v383
  %v392 = vunpack.c.l.b16 %v384
  %v393 = vunpack.c.l.b16 %v385
  %v394 = vunpack.c.l.b16 %v386
  %v395 = vpack.c.b16 %v392, %v391
  %v396 = vpack.c.b16 %v394, %v393
  %399 = vmatpush.bf16.msra.mxu0 0
  %400 = vmatpush.bf16.msra.mxu0 0
  %401 = vmatpush.bf16.msra.mxu0 0
  %402 = vmatpush.bf16.msra.mxu0 0
  %403 = vmatpush.bf16.msra.mxu0 0
  %404 = vmatpush.bf16.msra.mxu0 0
  %405 = vmatpush.bf16.msra.mxu0 %v396
  %406 = vmatpush.bf16.msra.mxu0 %v395
  %407 = vmatmul.bf16.gmra.mxu0 %v339
  %v408 = vpop.f32.mrf.mxu0
  %v409 = vadd.f32 0.0, %v408
  %v410 = vpop.f32.mrf.mxu0
  %411 = vdwg.mxu0
  %v412 = vmul.f32 %v351, %v81
  %v413 = vmul.f32 %v351, %v82
  %v414 = vmul.f32 %v351, %v83
  %v415 = vmul.f32 %v351, %v84
  %v417 = vsel %vm87, %v412, 0
  %v420 = vsel %vm87, %v413, 0
  %v423 = vsel %vm87, %v414, 0
  %v426 = vsel %vm87, %v415, 0
  %v429 = vsel %vm87, %v380, 0
  %431 = vmatpush.xpose.msra.mxu0 0.0
  %432 = vmatpush.xpose.msra.mxu0 0.0
  %433 = vmatpush.xpose.msra.mxu0 0.0
  %434 = vmatpush.xpose.msra.mxu0 0.0
  %435 = vmatpush.xpose.msra.mxu0 0.0
  %436 = vmatpush.xpose.msra.mxu0 0.0
  %437 = vmatpush.xpose.msra.mxu0 0.0
  %438 = vmatpush.xpose.msra.mxu0 0.0
  %439 = vmatpush.xpose.msra.mxu0 0.0
  %440 = vmatpush.xpose.msra.mxu0 0.0
  %441 = vmatpush.xpose.msra.mxu0 0.0
  %442 = vmatpush.xpose.msra.mxu0 0.0
  %443 = vmatpush.xpose.msra.mxu0 0.0
  %444 = vmatpush.xpose.msra.mxu0 0.0
  %445 = vmatpush.xpose.msra.mxu0 0.0
  %446 = vmatpush.xpose.msra.mxu0 %v429
  %447 = vmatmul.f32.gmra.mxu0 %v417
  %v448 = vpop.f32.mrf.mxu0
  %v449 = vadd.f32 %v77, %v448
  %450 = vmatmul.f32.gmra.mxu0 %v420
  %v451 = vpop.f32.mrf.mxu0
  %v452 = vadd.f32 %v78, %v451
  %453 = vmatmul.f32.gmra.mxu0 %v423
  %v454 = vpop.f32.mrf.mxu0
  %v455 = vadd.f32 %v79, %v454
  %456 = vmatmul.f32.gmra.mxu0 %v426
  %v457 = vpop.f32.mrf.mxu0
  %v458 = vadd.f32 %v80, %v457
  %459 = vdwg.mxu0
  %vm460 = vcmask 64512
  %v461 = vsel %vm460, %v449, -inf
  %462 = vmax.xlane.f32.xlu0 %v461
  %v463 = vpop.xlane.xlu0 %462
  %v464 = vsel %vm460, %v452, -inf
  %465 = vmax.xlane.f32.xlu0 %v464
  %v466 = vpop.xlane.xlu0 %465
  %v467 = vsel %vm460, %v455, -inf
  %468 = vmax.xlane.f32.xlu0 %v467
  %v469 = vpop.xlane.xlu0 %468
  %v470 = vsel %vm460, %v458, -inf
  %471 = vmax.xlane.f32.xlu0 %v470
  %v472 = vpop.xlane.xlu0 %471
  %v473 = vsub.f32 %v449, %v463
  %v474 = vsub.f32 %v452, %v466
  %v475 = vsub.f32 %v455, %v469
  %v476 = vsub.f32 %v458, %v472
  %v477 = vmul.f32 %v473, 1.442695
  %v478 = vpow.pop %v477
  %v479 = vmul.f32 %v474, 1.442695
  %v480 = vpow.pop %v479
  %v481 = vmul.f32 %v475, 1.442695
  %v482 = vpow.pop %v481
  %v483 = vmul.f32 %v476, 1.442695
  %v484 = vpow.pop %v483
  %v485 = vsel %vm460, %v478, 0.0
  %486 = vadd.xlane.f32.xlu0 %v485
  %v487 = vpop.xlane.xlu0 %486
  %v488 = vsel %vm460, %v480, 0.0
  %489 = vadd.xlane.f32.xlu0 %v488
  %v490 = vpop.xlane.xlu0 %489
  %v491 = vsel %vm460, %v482, 0.0
  %492 = vadd.xlane.f32.xlu0 %v491
  %v493 = vpop.xlane.xlu0 %492
  %v494 = vsel %vm460, %v484, 0.0
  %495 = vadd.xlane.f32.xlu0 %v494
  %v496 = vpop.xlane.xlu0 %495
  %v497 = vrcp.pop %v487
  %v498 = vrcp.pop %v490
  %v499 = vrcp.pop %v493
  %v500 = vrcp.pop %v496
  %v501 = vmul.f32 %v478, %v497
  %v502 = vmul.f32 %v480, %v498
  %v503 = vmul.f32 %v482, %v499
  %v504 = vmul.f32 %v484, %v500
  %v506 = vsel %vm460, %v501, 0
  %v509 = vsel %vm460, %v502, 0
  %v512 = vsel %vm460, %v503, 0
  %v515 = vsel %vm460, %v504, 0
  %517 = vmatpush.msra.mxu0 0.0
  %518 = vmatpush.msra.mxu0 0.0
  %519 = vmatpush.msra.mxu0 0.0
  %520 = vmatpush.msra.mxu0 0.0
  %521 = vmatpush.msra.mxu0 0.0
  %522 = vmatpush.msra.mxu0 0.0
  %523 = vmatpush.msra.mxu0 0.0
  %524 = vmatpush.msra.mxu0 0.0
  %525 = vmatpush.msra.mxu0 0.0
  %526 = vmatpush.msra.mxu0 0.0
  %527 = vmatpush.msra.mxu0 0.0
  %528 = vmatpush.msra.mxu0 0.0
  %529 = vmatpush.msra.mxu0 0.0
  %530 = vmatpush.msra.mxu0 0.0
  %531 = vmatpush.msra.mxu0 0.0
  %532 = vmatpush.msra.mxu0 %v409
  %533 = vmatmul.f32.gmra.mxu0 %v506
  %v534 = vpop.f32.mrf.mxu0
  %v535 = vadd.f32 0.0, %v534
  %536 = vmatmul.f32.gmra.mxu0 %v509
  %v537 = vpop.f32.mrf.mxu0
  %v538 = vadd.f32 0.0, %v537
  %539 = vmatmul.f32.gmra.mxu0 %v512
  %v540 = vpop.f32.mrf.mxu0
  %v541 = vadd.f32 0.0, %v540
  %542 = vmatmul.f32.gmra.mxu0 %v515
  %v543 = vpop.f32.mrf.mxu0
  %v544 = vadd.f32 0.0, %v543
  %545 = vdwg.mxu0
  %v546 = vmul.f32 %v535, %v81
  %v547 = vmul.f32 %v538, %v82
  %v548 = vmul.f32 %v541, %v83
  %v549 = vmul.f32 %v544, %v84
  %v550 = vpack.c.bf16 %v547, %v546
  %v551 = vpack.c.bf16 %v549, %v548
  %v552 = vld [vmem:[%s7] sm:$0xf]
  %v553 = vld [vmem:[%s7 + $0x4] sm:$0xf]
  %v554 = vld [vmem:[%s7 + $0x8] sm:$0xf]
  %v555 = vld [vmem:[%s7 + $0xc] sm:$0xf]
  %v556 = vld [vmem:[%s7 + $0x10] sm:$0xf]
  %v557 = vld [vmem:[%s7 + $0x14] sm:$0xf]
  %v558 = vld [vmem:[%s7 + $0x18] sm:$0xf]
  %v559 = vld [vmem:[%s7 + $0x1c] sm:$0xf]
  %v568 = vunpack.c.l.b16 %v552
  %v569 = vunpack.c.l.b16 %v553
  %v570 = vunpack.c.l.b16 %v554
  %v571 = vunpack.c.l.b16 %v555
  %v572 = vunpack.c.l.b16 %v556
  %v573 = vunpack.c.l.b16 %v557
  %v574 = vunpack.c.l.b16 %v558
  %v575 = vunpack.c.l.b16 %v559
  %v576 = vpack.c.b16 %v569, %v568
  %v577 = vpack.c.b16 %v571, %v570
  %v578 = vpack.c.b16 %v573, %v572
  %v579 = vpack.c.b16 %v575, %v574
  %v585 = vsel %vm87, %v550, 0
  %v588 = vsel %vm87, %v551, 0
  %590 = vmatpush.bf16.msra.mxu0 0
  %591 = vmatpush.bf16.msra.mxu0 0
  %592 = vmatpush.bf16.msra.mxu0 0
  %593 = vmatpush.bf16.msra.mxu0 0
  %594 = vmatpush.bf16.msra.mxu0 %v579
  %595 = vmatpush.bf16.msra.mxu0 %v578
  %596 = vmatpush.bf16.msra.mxu0 %v577
  %597 = vmatpush.bf16.msra.mxu0 %v576
  %598 = vmatmul.bf16.gmra.mxu0 %v585
  %v599 = vpop.f32.mrf.mxu0
  %v600 = vadd.f32 0.0, %v599
  %v601 = vpop.f32.mrf.mxu0
  %v602 = vadd.f32 0.0, %v601
  %603 = vmatmul.bf16.gmra.mxu0 %v588
  %v604 = vpop.f32.mrf.mxu0
  %v605 = vadd.f32 0.0, %v604
  %v606 = vpop.f32.mrf.mxu0
  %v607 = vadd.f32 0.0, %v606
  %608 = vdwg.mxu0
  %v609 = vadd.f32 %v600, %v602
  %v610 = vadd.f32 %v609, %v605
  %v611 = vadd.f32 %v610, %v607
  %v612 = vadd.f32 %v291, %v611
  %v613 = vsel %vm247, %v612, 0.0
  %614 = vadd.xlane.f32.xlu0 %v613
  %v615 = vpop.xlane.xlu0 %614
  %v616 = vmul.f32 %v615, %v257
  %v617 = vmul.f32 %v612, %v612
  %v618 = vsel %vm247, %v617, 0.0
  %619 = vadd.xlane.f32.xlu0 %v618
  %v620 = vpop.xlane.xlu0 %619
  %v621 = vmul.f32 %v620, %v257
  %v622 = vmul.f32 %v616, %v616
  %v623 = vsub.f32 %v621, %v622
  %v624 = vmax.f32 %v623, 0.0
  %v625 = vsub.f32 %v612, %v616
  %v626 = vadd.f32 %v624, 1e-05
  %v627 = vrsqrt.pop %v626
  %v628 = vmul.f32 %v627, %v626
  %v629 = vmul.f32 %v628, %v627
  %v630 = vmul.f32 0.5, %v629
  %v631 = vsub.f32 1.5, %v630
  %v632 = vmul.f32 %v627, %v631
  %vm633 = vweird.f32 %v626
  %vm634 = vweird.f32 %v627
  %vm635 = vmor %vm633, %vm634
  %v636 = vsel %vm635, %v627, %v632
  %v637 = vmul.f32 %v625, %v636
  %v638 = vperm.slane %v50, 0
  %v639 = vmul.f32 %v637, %v638
  %v640 = vperm.slane %v50, 1
  %v641 = vadd.f32 %v639, %v640
  %v642 = vld [vmem:[%s8] sm:$0xf]
  %v643 = vld [vmem:[%s8 + $0x4] sm:$0xf]
  %v644 = vld [vmem:[%s8 + $0x8] sm:$0xf]
  %v645 = vld [vmem:[%s8 + $0xc] sm:$0xf]
  %v646 = vld [vmem:[%s8 + $0x10] sm:$0x1]
  %v647 = vpack.c.bf16 %v641, %v641
  %v648 = vunpack.c.l.bf16 %v646
  %v649 = vperm.slane %v648, 0
  %v654 = vunpack.c.l.b16 %v642
  %v655 = vunpack.c.l.b16 %v643
  %v656 = vunpack.c.l.b16 %v644
  %v657 = vunpack.c.l.b16 %v645
  %v658 = vpack.c.b16 %v655, %v654
  %v659 = vpack.c.b16 %v657, %v656
  %v663 = vsel %vm247, %v647, 0
  %665 = vmatpush.bf16.msra.mxu0 0
  %666 = vmatpush.bf16.msra.mxu0 0
  %667 = vmatpush.bf16.msra.mxu0 0
  %668 = vmatpush.bf16.msra.mxu0 0
  %669 = vmatpush.bf16.msra.mxu0 0
  %670 = vmatpush.bf16.msra.mxu0 0
  %671 = vmatpush.bf16.msra.mxu0 %v659
  %672 = vmatpush.bf16.msra.mxu0 %v658
  %673 = vmatmul.bf16.gmra.mxu0 %v663
  %v674 = vpop.f32.mrf.mxu0
  %v675 = vadd.f32 %v649, %v674
  %v676 = vpop.f32.mrf.mxu0
  %677 = vdwg.mxu0
  %v678 = vmul.f32 %v675, 0.5
  %v679 = vmul.f32 %v675, 0.70710677
  %v680 = vand.u32 2147483647, %v679
  %v681 = vmul.f32 %v680, 0.3275911
  %v682 = vadd.f32 %v681, 1.0
  %v683 = vrcp.pop %v682
  %v684 = vmul.f32 %v682, %v683
  %v685 = vsub.f32 1.0, %v684
  %v686 = vmul.f32 %v683, %v685
  %v687 = vadd.f32 %v683, %v686
  %vm688 = vweird.f32 %v682
  %vm689 = vweird.f32 %v683
  %vm690 = vmor %vm688, %vm689
  %v691 = vsel %vm690, %v683, %v687
  %v692 = vand.u32 2147483647, %v682
  %vm693 = vcmp.eq.f32.partialorder %v692, 8.507059e+37
  %v694 = vand.u32 %v682, 2147483648
  %v695 = vor.u32 1.1754944e-38, %v694
  %v696 = vsel %vm693, %v695, %v691
  %v697 = vmul.f32 1.0, %v696
  %v698 = vmul.f32 %v697, 1.0614054
  %v699 = vadd.f32 %v698, -1.4531521
  %v700 = vmul.f32 %v699, %v697
  %v701 = vadd.f32 %v700, 1.4214138
  %v702 = vmul.f32 %v701, %v697
  %v703 = vadd.f32 %v702, -0.28449672
  %v704 = vmul.f32 %v703, %v697
  %v705 = vadd.f32 %v704, 0.2548296
  %v706 = vmul.f32 %v705, %v697
  %v707 = vsub.f32 0.0, %v680
  %v708 = vmul.f32 %v707, %v680
  %v709 = vmul.f32 %v708, 1.442695
  %v710 = vpow.pop %v709
  %v711 = vmul.f32 %v706, %v710
  %v712 = vsub.f32 1.0, %v711
  %vm713 = vcmp.lt.f32.partialorder %v679, 0.0
  %v714 = vsub.f32 0.0, %v712
  %v715 = vsel %vm713, %v714, %v712
  %v716 = vadd.f32 %v715, 1.0
  %v717 = vmul.f32 %v678, %v716
  %v718 = vpack.c.bf16 %v717, %v717
  %v719 = vld [vmem:[%s9] sm:$0xf]
  %v720 = vld [vmem:[%s9 + $0x4] sm:$0xf]
  %v721 = vld [vmem:[%s9 + $0x8] sm:$0xf]
  %v722 = vld [vmem:[%s9 + $0xc] sm:$0xf]
  %v723 = vld [vmem:[%s9 + $0x10] sm:$0xf]
  %v724 = vld [vmem:[%s9 + $0x14] sm:$0xf]
  %v725 = vld [vmem:[%s9 + $0x18] sm:$0xf]
  %v726 = vld [vmem:[%s9 + $0x1c] sm:$0xf]
  %v727 = vperm.slane %v50, 4
  %v736 = vunpack.c.l.b16 %v719
  %v737 = vunpack.c.l.b16 %v720
  %v738 = vunpack.c.l.b16 %v721
  %v739 = vunpack.c.l.b16 %v722
  %v740 = vunpack.c.l.b16 %v723
  %v741 = vunpack.c.l.b16 %v724
  %v742 = vunpack.c.l.b16 %v725
  %v743 = vunpack.c.l.b16 %v726
  %v744 = vpack.c.b16 %v737, %v736
  %v745 = vpack.c.b16 %v739, %v738
  %v746 = vpack.c.b16 %v741, %v740
  %v747 = vpack.c.b16 %v743, %v742
  %v753 = vsel %vm87, %v718, 0
  %755 = vmatpush.bf16.msra.mxu0 0
  %756 = vmatpush.bf16.msra.mxu0 0
  %757 = vmatpush.bf16.msra.mxu0 0
  %758 = vmatpush.bf16.msra.mxu0 0
  %759 = vmatpush.bf16.msra.mxu0 %v747
  %760 = vmatpush.bf16.msra.mxu0 %v746
  %761 = vmatpush.bf16.msra.mxu0 %v745
  %762 = vmatpush.bf16.msra.mxu0 %v744
  %763 = vmatmul.bf16.gmra.mxu0 %v753
  %v764 = vpop.f32.mrf.mxu0
  %v765 = vadd.f32 %v727, %v764
  %v766 = vpop.f32.mrf.mxu0
  %767 = vdwg.mxu0
  %v768 = vadd.f32 %v612, %v765
  %v769 = vsel %vm247, %v768, 0.0
  %770 = vadd.xlane.f32.xlu0 %v769
  %v771 = vpop.xlane.xlu0 %770
  %v772 = vmul.f32 %v771, %v257
  %v773 = vmul.f32 %v768, %v768
  %v774 = vsel %vm247, %v773, 0.0
  %775 = vadd.xlane.f32.xlu0 %v774
  %v776 = vpop.xlane.xlu0 %775
  %v777 = vmul.f32 %v776, %v257
  %v778 = vmul.f32 %v772, %v772
  %v779 = vsub.f32 %v777, %v778
  %v780 = vmax.f32 %v779, 0.0
  %v781 = vsub.f32 %v768, %v772
  %v782 = vadd.f32 %v780, 1e-05
  %v783 = vrsqrt.pop %v782
  %v784 = vmul.f32 %v783, %v782
  %v785 = vmul.f32 %v784, %v783
  %v786 = vmul.f32 0.5, %v785
  %v787 = vsub.f32 1.5, %v786
  %v788 = vmul.f32 %v783, %v787
  %vm789 = vweird.f32 %v782
  %vm790 = vweird.f32 %v783
  %vm791 = vmor %vm789, %vm790
  %v792 = vsel %vm791, %v783, %v788
  %v793 = vmul.f32 %v781, %v792
  %v794 = vperm.slane %v49, 6
  %v795 = vmul.f32 %v793, %v794
  %v796 = vperm.slane %v49, 7
  %v797 = vadd.f32 %v795, %v796
  %v798 = vpack.c.bf16 %v797, %v797
  %s799 = scalar_lea.vmem %s4, 16
  %v800 = vld [vmem:[%s799] sm:$0xf]
  %v801 = vld [vmem:[%s799 + $0x4] sm:$0xf]
  %v802 = vld [vmem:[%s799 + $0x8] sm:$0xf]
  %v803 = vld [vmem:[%s799 + $0xc] sm:$0xf]
  %v808 = vunpack.c.l.b16 %v800
  %v809 = vunpack.c.l.b16 %v801
  %v810 = vunpack.c.l.b16 %v802
  %v811 = vunpack.c.l.b16 %v803
  %v812 = vpack.c.b16 %v809, %v808
  %v813 = vpack.c.b16 %v811, %v810
  %v817 = vsel %vm247, %v798, 0
  %819 = vmatpush.bf16.msra.mxu0 0
  %820 = vmatpush.bf16.msra.mxu0 0
  %821 = vmatpush.bf16.msra.mxu0 0
  %822 = vmatpush.bf16.msra.mxu0 0
  %823 = vmatpush.bf16.msra.mxu0 0
  %824 = vmatpush.bf16.msra.mxu0 0
  %825 = vmatpush.bf16.msra.mxu0 %v813
  %826 = vmatpush.bf16.msra.mxu0 %v812
  %827 = vmatmul.bf16.gmra.mxu0 %v817
  %v828 = vpop.f32.mrf.mxu0
  %v829 = vadd.f32 0.0, %v828
  %v830 = vpop.f32.mrf.mxu0
  %831 = vdwg.mxu0
  %s832 = scalar_lea.vmem %s5, 16
  %v833 = vld [vmem:[%s832] sm:$0xf]
  %v834 = vld [vmem:[%s832 + $0x4] sm:$0xf]
  %v835 = vld [vmem:[%s832 + $0x8] sm:$0xf]
  %v836 = vld [vmem:[%s832 + $0xc] sm:$0xf]
  %v841 = vunpack.c.l.b16 %v833
  %v842 = vunpack.c.l.b16 %v834
  %v843 = vunpack.c.l.b16 %v835
  %v844 = vunpack.c.l.b16 %v836
  %v845 = vpack.c.b16 %v842, %v841
  %v846 = vpack.c.b16 %v844, %v843
  %849 = vmatpush.bf16.msra.mxu0 0
  %850 = vmatpush.bf16.msra.mxu0 0
  %851 = vmatpush.bf16.msra.mxu0 0
  %852 = vmatpush.bf16.msra.mxu0 0
  %853 = vmatpush.bf16.msra.mxu0 0
  %854 = vmatpush.bf16.msra.mxu0 0
  %855 = vmatpush.bf16.msra.mxu0 %v846
  %856 = vmatpush.bf16.msra.mxu0 %v845
  %857 = vmatmul.bf16.gmra.mxu0 %v817
  %v858 = vpop.f32.mrf.mxu0
  %v859 = vadd.f32 0.0, %v858
  %v860 = vpop.f32.mrf.mxu0
  %861 = vdwg.mxu0
  %s862 = scalar_lea.vmem %s6, 16
  %v863 = vld [vmem:[%s862] sm:$0xf]
  %v864 = vld [vmem:[%s862 + $0x4] sm:$0xf]
  %v865 = vld [vmem:[%s862 + $0x8] sm:$0xf]
  %v866 = vld [vmem:[%s862 + $0xc] sm:$0xf]
  %v871 = vunpack.c.l.b16 %v863
  %v872 = vunpack.c.l.b16 %v864
  %v873 = vunpack.c.l.b16 %v865
  %v874 = vunpack.c.l.b16 %v866
  %v875 = vpack.c.b16 %v872, %v871
  %v876 = vpack.c.b16 %v874, %v873
  %879 = vmatpush.bf16.msra.mxu0 0
  %880 = vmatpush.bf16.msra.mxu0 0
  %881 = vmatpush.bf16.msra.mxu0 0
  %882 = vmatpush.bf16.msra.mxu0 0
  %883 = vmatpush.bf16.msra.mxu0 0
  %884 = vmatpush.bf16.msra.mxu0 0
  %885 = vmatpush.bf16.msra.mxu0 %v876
  %886 = vmatpush.bf16.msra.mxu0 %v875
  %887 = vmatmul.bf16.gmra.mxu0 %v817
  %v888 = vpop.f32.mrf.mxu0
  %v889 = vadd.f32 0.0, %v888
  %v890 = vpop.f32.mrf.mxu0
  %891 = vdwg.mxu0
  %v892 = vmul.f32 %v829, %v81
  %v893 = vmul.f32 %v829, %v82
  %v894 = vmul.f32 %v829, %v83
  %v895 = vmul.f32 %v829, %v84
  %v897 = vsel %vm87, %v892, 0
  %v900 = vsel %vm87, %v893, 0
  %v903 = vsel %vm87, %v894, 0
  %v906 = vsel %vm87, %v895, 0
  %v909 = vsel %vm87, %v859, 0
  %911 = vmatpush.xpose.msra.mxu0 0.0
  %912 = vmatpush.xpose.msra.mxu0 0.0
  %913 = vmatpush.xpose.msra.mxu0 0.0
  %914 = vmatpush.xpose.msra.mxu0 0.0
  %915 = vmatpush.xpose.msra.mxu0 0.0
  %916 = vmatpush.xpose.msra.mxu0 0.0
  %917 = vmatpush.xpose.msra.mxu0 0.0
  %918 = vmatpush.xpose.msra.mxu0 0.0
  %919 = vmatpush.xpose.msra.mxu0 0.0
  %920 = vmatpush.xpose.msra.mxu0 0.0
  %921 = vmatpush.xpose.msra.mxu0 0.0
  %922 = vmatpush.xpose.msra.mxu0 0.0
  %923 = vmatpush.xpose.msra.mxu0 0.0
  %924 = vmatpush.xpose.msra.mxu0 0.0
  %925 = vmatpush.xpose.msra.mxu0 0.0
  %926 = vmatpush.xpose.msra.mxu0 %v909
  %927 = vmatmul.f32.gmra.mxu0 %v897
  %v928 = vpop.f32.mrf.mxu0
  %v929 = vadd.f32 %v77, %v928
  %930 = vmatmul.f32.gmra.mxu0 %v900
  %v931 = vpop.f32.mrf.mxu0
  %v932 = vadd.f32 %v78, %v931
  %933 = vmatmul.f32.gmra.mxu0 %v903
  %v934 = vpop.f32.mrf.mxu0
  %v935 = vadd.f32 %v79, %v934
  %936 = vmatmul.f32.gmra.mxu0 %v906
  %v937 = vpop.f32.mrf.mxu0
  %v938 = vadd.f32 %v80, %v937
  %939 = vdwg.mxu0
  %v940 = vsel %vm460, %v929, -inf
  %941 = vmax.xlane.f32.xlu0 %v940
  %v942 = vpop.xlane.xlu0 %941
  %v943 = vsel %vm460, %v932, -inf
  %944 = vmax.xlane.f32.xlu0 %v943
  %v945 = vpop.xlane.xlu0 %944
  %v946 = vsel %vm460, %v935, -inf
  %947 = vmax.xlane.f32.xlu0 %v946
  %v948 = vpop.xlane.xlu0 %947
  %v949 = vsel %vm460, %v938, -inf
  %950 = vmax.xlane.f32.xlu0 %v949
  %v951 = vpop.xlane.xlu0 %950
  %v952 = vsub.f32 %v929, %v942
  %v953 = vsub.f32 %v932, %v945
  %v954 = vsub.f32 %v935, %v948
  %v955 = vsub.f32 %v938, %v951
  %v956 = vmul.f32 %v952, 1.442695
  %v957 = vpow.pop %v956
  %v958 = vmul.f32 %v953, 1.442695
  %v959 = vpow.pop %v958
  %v960 = vmul.f32 %v954, 1.442695
  %v961 = vpow.pop %v960
  %v962 = vmul.f32 %v955, 1.442695
  %v963 = vpow.pop %v962
  %v964 = vsel %vm460, %v957, 0.0
  %965 = vadd.xlane.f32.xlu0 %v964
  %v966 = vpop.xlane.xlu0 %965
  %v967 = vsel %vm460, %v959, 0.0
  %968 = vadd.xlane.f32.xlu0 %v967
  %v969 = vpop.xlane.xlu0 %968
  %v970 = vsel %vm460, %v961, 0.0
  %971 = vadd.xlane.f32.xlu0 %v970
  %v972 = vpop.xlane.xlu0 %971
  %v973 = vsel %vm460, %v963, 0.0
  %974 = vadd.xlane.f32.xlu0 %v973
  %v975 = vpop.xlane.xlu0 %974
  %v976 = vrcp.pop %v966
  %v977 = vrcp.pop %v969
  %v978 = vrcp.pop %v972
  %v979 = vrcp.pop %v975
  %v980 = vmul.f32 %v957, %v976
  %v981 = vmul.f32 %v959, %v977
  %v982 = vmul.f32 %v961, %v978
  %v983 = vmul.f32 %v963, %v979
  %v985 = vsel %vm460, %v980, 0
  %v988 = vsel %vm460, %v981, 0
  %v991 = vsel %vm460, %v982, 0
  %v994 = vsel %vm460, %v983, 0
  %996 = vmatpush.msra.mxu0 0.0
  %997 = vmatpush.msra.mxu0 0.0
  %998 = vmatpush.msra.mxu0 0.0
  %999 = vmatpush.msra.mxu0 0.0
  %1000 = vmatpush.msra.mxu0 0.0
  %1001 = vmatpush.msra.mxu0 0.0
  %1002 = vmatpush.msra.mxu0 0.0
  %1003 = vmatpush.msra.mxu0 0.0
  %1004 = vmatpush.msra.mxu0 0.0
  %1005 = vmatpush.msra.mxu0 0.0
  %1006 = vmatpush.msra.mxu0 0.0
  %1007 = vmatpush.msra.mxu0 0.0
  %1008 = vmatpush.msra.mxu0 0.0
  %1009 = vmatpush.msra.mxu0 0.0
  %1010 = vmatpush.msra.mxu0 0.0
  %1011 = vmatpush.msra.mxu0 %v889
  %1012 = vmatmul.f32.gmra.mxu0 %v985
  %v1013 = vpop.f32.mrf.mxu0
  %v1014 = vadd.f32 0.0, %v1013
  %1015 = vmatmul.f32.gmra.mxu0 %v988
  %v1016 = vpop.f32.mrf.mxu0
  %v1017 = vadd.f32 0.0, %v1016
  %1018 = vmatmul.f32.gmra.mxu0 %v991
  %v1019 = vpop.f32.mrf.mxu0
  %v1020 = vadd.f32 0.0, %v1019
  %1021 = vmatmul.f32.gmra.mxu0 %v994
  %v1022 = vpop.f32.mrf.mxu0
  %v1023 = vadd.f32 0.0, %v1022
  %1024 = vdwg.mxu0
  %v1025 = vmul.f32 %v1014, %v81
  %v1026 = vmul.f32 %v1017, %v82
  %v1027 = vmul.f32 %v1020, %v83
  %v1028 = vmul.f32 %v1023, %v84
  %v1029 = vpack.c.bf16 %v1026, %v1025
  %v1030 = vpack.c.bf16 %v1028, %v1027
  %s1031 = scalar_lea.vmem %s7, 32
  %v1032 = vld [vmem:[%s1031] sm:$0xf]
  %v1033 = vld [vmem:[%s1031 + $0x4] sm:$0xf]
  %v1034 = vld [vmem:[%s1031 + $0x8] sm:$0xf]
  %v1035 = vld [vmem:[%s1031 + $0xc] sm:$0xf]
  %v1036 = vld [vmem:[%s1031 + $0x10] sm:$0xf]
  %v1037 = vld [vmem:[%s1031 + $0x14] sm:$0xf]
  %v1038 = vld [vmem:[%s1031 + $0x18] sm:$0xf]
  %v1039 = vld [vmem:[%s1031 + $0x1c] sm:$0xf]
  %v1048 = vunpack.c.l.b16 %v1032
  %v1049 = vunpack.c.l.b16 %v1033
  %v1050 = vunpack.c.l.b16 %v1034
  %v1051 = vunpack.c.l.b16 %v1035
  %v1052 = vunpack.c.l.b16 %v1036
  %v1053 = vunpack.c.l.b16 %v1037
  %v1054 = vunpack.c.l.b16 %v1038
  %v1055 = vunpack.c.l.b16 %v1039
  %v1056 = vpack.c.b16 %v1049, %v1048
  %v1057 = vpack.c.b16 %v1051, %v1050
  %v1058 = vpack.c.b16 %v1053, %v1052
  %v1059 = vpack.c.b16 %v1055, %v1054
  %v1065 = vsel %vm87, %v1029, 0
  %v1068 = vsel %vm87, %v1030, 0
  %1070 = vmatpush.bf16.msra.mxu0 0
  %1071 = vmatpush.bf16.msra.mxu0 0
  %1072 = vmatpush.bf16.msra.mxu0 0
  %1073 = vmatpush.bf16.msra.mxu0 0
  %1074 = vmatpush.bf16.msra.mxu0 %v1059
  %1075 = vmatpush.bf16.msra.mxu0 %v1058
  %1076 = vmatpush.bf16.msra.mxu0 %v1057
  %1077 = vmatpush.bf16.msra.mxu0 %v1056
  %1078 = vmatmul.bf16.gmra.mxu0 %v1065
  %v1079 = vpop.f32.mrf.mxu0
  %v1080 = vadd.f32 0.0, %v1079
  %v1081 = vpop.f32.mrf.mxu0
  %v1082 = vadd.f32 0.0, %v1081
  %1083 = vmatmul.bf16.gmra.mxu0 %v1068
  %v1084 = vpop.f32.mrf.mxu0
  %v1085 = vadd.f32 0.0, %v1084
  %v1086 = vpop.f32.mrf.mxu0
  %v1087 = vadd.f32 0.0, %v1086
  %1088 = vdwg.mxu0
  %v1089 = vadd.f32 %v1080, %v1082
  %v1090 = vadd.f32 %v1089, %v1085
  %v1091 = vadd.f32 %v1090, %v1087
  %v1092 = vadd.f32 %v768, %v1091
  %v1093 = vsel %vm247, %v1092, 0.0
  %1094 = vadd.xlane.f32.xlu0 %v1093
  %v1095 = vpop.xlane.xlu0 %1094
  %v1096 = vmul.f32 %v1095, %v257
  %v1097 = vmul.f32 %v1092, %v1092
  %v1098 = vsel %vm247, %v1097, 0.0
  %1099 = vadd.xlane.f32.xlu0 %v1098
  %v1100 = vpop.xlane.xlu0 %1099
  %v1101 = vmul.f32 %v1100, %v257
  %v1102 = vmul.f32 %v1096, %v1096
  %v1103 = vsub.f32 %v1101, %v1102
  %v1104 = vmax.f32 %v1103, 0.0
  %v1105 = vsub.f32 %v1092, %v1096
  %v1106 = vadd.f32 %v1104, 1e-05
  %v1107 = vrsqrt.pop %v1106
  %v1108 = vmul.f32 %v1107, %v1106
  %v1109 = vmul.f32 %v1108, %v1107
  %v1110 = vmul.f32 0.5, %v1109
  %v1111 = vsub.f32 1.5, %v1110
  %v1112 = vmul.f32 %v1107, %v1111
  %vm1113 = vweird.f32 %v1106
  %vm1114 = vweird.f32 %v1107
  %vm1115 = vmor %vm1113, %vm1114
  %v1116 = vsel %vm1115, %v1107, %v1112
  %v1117 = vmul.f32 %v1105, %v1116
  %v1118 = vperm.slane %v50, 2
  %v1119 = vmul.f32 %v1117, %v1118
  %v1120 = vperm.slane %v50, 3
  %v1121 = vadd.f32 %v1119, %v1120
  %s1122 = scalar_lea.vmem %s8, 20
  %v1123 = vld [vmem:[%s1122] sm:$0xf]
  %v1124 = vld [vmem:[%s1122 + $0x4] sm:$0xf]
  %v1125 = vld [vmem:[%s1122 + $0x8] sm:$0xf]
  %v1126 = vld [vmem:[%s1122 + $0xc] sm:$0xf]
  %v1127 = vld [vmem:[%s1122 + $0x10] sm:$0x1]
  %v1128 = vpack.c.bf16 %v1121, %v1121
  %v1129 = vunpack.c.l.bf16 %v1127
  %v1130 = vperm.slane %v1129, 0
  %v1135 = vunpack.c.l.b16 %v1123
  %v1136 = vunpack.c.l.b16 %v1124
  %v1137 = vunpack.c.l.b16 %v1125
  %v1138 = vunpack.c.l.b16 %v1126
  %v1139 = vpack.c.b16 %v1136, %v1135
  %v1140 = vpack.c.b16 %v1138, %v1137
  %v1144 = vsel %vm247, %v1128, 0
  %1146 = vmatpush.bf16.msra.mxu0 0
  %1147 = vmatpush.bf16.msra.mxu0 0
  %1148 = vmatpush.bf16.msra.mxu0 0
  %1149 = vmatpush.bf16.msra.mxu0 0
  %1150 = vmatpush.bf16.msra.mxu0 0
  %1151 = vmatpush.bf16.msra.mxu0 0
  %1152 = vmatpush.bf16.msra.mxu0 %v1140
  %1153 = vmatpush.bf16.msra.mxu0 %v1139
  %1154 = vmatmul.bf16.gmra.mxu0 %v1144
  %v1155 = vpop.f32.mrf.mxu0
  %v1156 = vadd.f32 %v1130, %v1155
  %v1157 = vpop.f32.mrf.mxu0
  %1158 = vdwg.mxu0
  %v1159 = vmul.f32 %v1156, 0.5
  %v1160 = vmul.f32 %v1156, 0.70710677
  %v1161 = vand.u32 2147483647, %v1160
  %v1162 = vmul.f32 %v1161, 0.3275911
  %v1163 = vadd.f32 %v1162, 1.0
  %v1164 = vrcp.pop %v1163
  %v1165 = vmul.f32 %v1163, %v1164
  %v1166 = vsub.f32 1.0, %v1165
  %v1167 = vmul.f32 %v1164, %v1166
  %v1168 = vadd.f32 %v1164, %v1167
  %vm1169 = vweird.f32 %v1163
  %vm1170 = vweird.f32 %v1164
  %vm1171 = vmor %vm1169, %vm1170
  %v1172 = vsel %vm1171, %v1164, %v1168
  %v1173 = vand.u32 2147483647, %v1163
  %vm1174 = vcmp.eq.f32.partialorder %v1173, 8.507059e+37
  %v1175 = vand.u32 %v1163, 2147483648
  %v1176 = vor.u32 1.1754944e-38, %v1175
  %v1177 = vsel %vm1174, %v1176, %v1172
  %v1178 = vmul.f32 1.0, %v1177
  %v1179 = vmul.f32 %v1178, 1.0614054
  %v1180 = vadd.f32 %v1179, -1.4531521
  %v1181 = vmul.f32 %v1180, %v1178
  %v1182 = vadd.f32 %v1181, 1.4214138
  %v1183 = vmul.f32 %v1182, %v1178
  %v1184 = vadd.f32 %v1183, -0.28449672
  %v1185 = vmul.f32 %v1184, %v1178
  %v1186 = vadd.f32 %v1185, 0.2548296
  %v1187 = vmul.f32 %v1186, %v1178
  %v1188 = vsub.f32 0.0, %v1161
  %v1189 = vmul.f32 %v1188, %v1161
  %v1190 = vmul.f32 %v1189, 1.442695
  %v1191 = vpow.pop %v1190
  %v1192 = vmul.f32 %v1187, %v1191
  %v1193 = vsub.f32 1.0, %v1192
  %vm1194 = vcmp.lt.f32.partialorder %v1160, 0.0
  %v1195 = vsub.f32 0.0, %v1193
  %v1196 = vsel %vm1194, %v1195, %v1193
  %v1197 = vadd.f32 %v1196, 1.0
  %v1198 = vmul.f32 %v1159, %v1197
  %v1199 = vpack.c.bf16 %v1198, %v1198
  %s1200 = scalar_lea.vmem %s9, 32
  %v1201 = vld [vmem:[%s1200] sm:$0xf]
  %v1202 = vld [vmem:[%s1200 + $0x4] sm:$0xf]
  %v1203 = vld [vmem:[%s1200 + $0x8] sm:$0xf]
  %v1204 = vld [vmem:[%s1200 + $0xc] sm:$0xf]
  %v1205 = vld [vmem:[%s1200 + $0x10] sm:$0xf]
  %v1206 = vld [vmem:[%s1200 + $0x14] sm:$0xf]
  %v1207 = vld [vmem:[%s1200 + $0x18] sm:$0xf]
  %v1208 = vld [vmem:[%s1200 + $0x1c] sm:$0xf]
  %v1209 = vperm.slane %v50, 5
  %v1218 = vunpack.c.l.b16 %v1201
  %v1219 = vunpack.c.l.b16 %v1202
  %v1220 = vunpack.c.l.b16 %v1203
  %v1221 = vunpack.c.l.b16 %v1204
  %v1222 = vunpack.c.l.b16 %v1205
  %v1223 = vunpack.c.l.b16 %v1206
  %v1224 = vunpack.c.l.b16 %v1207
  %v1225 = vunpack.c.l.b16 %v1208
  %v1226 = vpack.c.b16 %v1219, %v1218
  %v1227 = vpack.c.b16 %v1221, %v1220
  %v1228 = vpack.c.b16 %v1223, %v1222
  %v1229 = vpack.c.b16 %v1225, %v1224
  %v1235 = vsel %vm87, %v1199, 0
  %1237 = vmatpush.bf16.msra.mxu0 0
  %1238 = vmatpush.bf16.msra.mxu0 0
  %1239 = vmatpush.bf16.msra.mxu0 0
  %1240 = vmatpush.bf16.msra.mxu0 0
  %1241 = vmatpush.bf16.msra.mxu0 %v1229
  %1242 = vmatpush.bf16.msra.mxu0 %v1228
  %1243 = vmatpush.bf16.msra.mxu0 %v1227
  %1244 = vmatpush.bf16.msra.mxu0 %v1226
  %1245 = vmatmul.bf16.gmra.mxu0 %v1235
  %v1246 = vpop.f32.mrf.mxu0
  %v1247 = vadd.f32 %v1209, %v1246
  %v1248 = vpop.f32.mrf.mxu0
  %1249 = vdwg.mxu0
  %v1250 = vadd.f32 %v1092, %v1247
  %v1251 = vsel %vm247, %v1250, 0.0
  %1252 = vadd.xlane.f32.xlu0 %v1251
  %v1253 = vpop.xlane.xlu0 %1252
  %v1254 = vmul.f32 %v1253, %v257
  %v1255 = vmul.f32 %v1250, %v1250
  %v1256 = vsel %vm247, %v1255, 0.0
  %1257 = vadd.xlane.f32.xlu0 %v1256
  %v1258 = vpop.xlane.xlu0 %1257
  %v1259 = vmul.f32 %v1258, %v257
  %v1260 = vmul.f32 %v1254, %v1254
  %v1261 = vsub.f32 %v1259, %v1260
  %v1262 = vmax.f32 %v1261, 0.0
  %v1263 = vsub.f32 %v1250, %v1254
  %v1264 = vadd.f32 %v1262, 1e-05
  %v1265 = vrsqrt.pop %v1264
  %v1266 = vmul.f32 %v1265, %v1264
  %v1267 = vmul.f32 %v1266, %v1265
  %v1268 = vmul.f32 0.5, %v1267
  %v1269 = vsub.f32 1.5, %v1268
  %v1270 = vmul.f32 %v1265, %v1269
  %vm1271 = vweird.f32 %v1264
  %vm1272 = vweird.f32 %v1265
  %vm1273 = vmor %vm1271, %vm1272
  %v1274 = vsel %vm1273, %v1265, %v1270
  %v1275 = vmul.f32 %v1263, %v1274
  %v1276 = vperm.slane %v48, 2
  %v1277 = vmul.f32 %v1275, %v1276
  %v1278 = vperm.slane %v48, 3
  %v1279 = vadd.f32 %v1277, %v1278
  %v1280 = vld [vmem:[%s13] sm:$0xf]
  %v1281 = vpack.c.bf16 %v1279, %v1279
  %v1283 = vsel %vm460, %v1280, 0
  %v1286 = vsel %vm286, %v1281, 0
  %1288 = vmatpush.bf16.msra.mxu0 0
  %1289 = vmatpush.bf16.msra.mxu0 0
  %1290 = vmatpush.bf16.msra.mxu0 0
  %1291 = vmatpush.bf16.msra.mxu0 0
  %1292 = vmatpush.bf16.msra.mxu0 0
  %1293 = vmatpush.bf16.msra.mxu0 0
  %1294 = vmatpush.bf16.msra.mxu0 0
  %1295 = vmatpush.bf16.msra.mxu0 %v1286
  %1296 = vmatmul.bf16.gmra.mxu0 %v1283
  %v1297 = vpop.f32.mrf.mxu0
  %v1298 = vadd.f32 0.0, %v1297
  %v1299 = vpop.f32.mrf.mxu0
  %1300 = vdwg.mxu0
  %v1301 = vld [vmem:[%s10] sm:$0xf]
  %v1302 = vld [vmem:[%s10 + $0x4] sm:$0xf]
  %v1303 = vld [vmem:[%s10 + $0x8] sm:$0xf]
  %v1304 = vld [vmem:[%s10 + $0xc] sm:$0xf]
  %v1305 = vld [vmem:[%s10 + $0x10] sm:$0x1]
  %v1306 = vpack.c.bf16 %v1298, %v1298
  %v1307 = vunpack.c.l.bf16 %v1305
  %v1308 = vperm.slane %v1307, 0
  %v1313 = vunpack.c.l.b16 %v1301
  %v1314 = vunpack.c.l.b16 %v1302
  %v1315 = vunpack.c.l.b16 %v1303
  %v1316 = vunpack.c.l.b16 %v1304
  %v1317 = vpack.c.b16 %v1314, %v1313
  %v1318 = vpack.c.b16 %v1316, %v1315
  %v1322 = vsel %vm247, %v1306, 0
  %1324 = vmatpush.bf16.msra.mxu0 0
  %1325 = vmatpush.bf16.msra.mxu0 0
  %1326 = vmatpush.bf16.msra.mxu0 0
  %1327 = vmatpush.bf16.msra.mxu0 0
  %1328 = vmatpush.bf16.msra.mxu0 0
  %1329 = vmatpush.bf16.msra.mxu0 0
  %1330 = vmatpush.bf16.msra.mxu0 %v1318
  %1331 = vmatpush.bf16.msra.mxu0 %v1317
  %1332 = vmatmul.bf16.gmra.mxu0 %v1322
  %v1333 = vpop.f32.mrf.mxu0
  %v1334 = vadd.f32 %v1308, %v1333
  %v1335 = vpop.f32.mrf.mxu0
  %1336 = vdwg.mxu0
  %1337 = vst [vmem:[%s14] sm:$0xff] %v1334
  // Predicated region
  $region58: #{vit_forward.1} parent=0 // pred_check
    _
  $region59: #{vit_forward.1} parent=0 // pred_check_branch
    %1339 = sbr.rel (0) target = $region61
  $region60: #{vit_forward.1} parent=0 // pred_region
    _
  $region61: #{vit_forward.1} parent=0 // pred_fallthru
    _
  // Predicated region
  $region62: #{vit_forward.1} parent=0 // pred_check
    _
  $region63: #{vit_forward.1} parent=0 // pred_check_branch
    %1341 = sbr.rel (0) target = $region65
  $region64: #{vit_forward.1} parent=0 // pred_region
    _
  $region65: #{vit_forward.1} parent=0 // pred_fallthru
    _

</llo_original>
